<compile_context>
chip_gen: v5e
topology: v5e:2x2
jax: 0.10.0
libtpu: 0.0.40
codegen_flags: <defaults>
</compile_context>

<pallas_src>
import jax
import jax.numpy as jnp
from jax import lax
from jax.experimental import pallas as pl
from jax.experimental.pallas import tpu as pltpu

_LN_EPS = 1e-5
_NRM_EPS = 1e-12


# --------------------------------------------------------------------------------------
# Kernel 1: input LayerNorm + single fused QKV projection + per-head L2 norm / scales
# --------------------------------------------------------------------------------------
def _qkv_proj_kernel(x_ref, wqkv_ref, gin_ref, bin_ref, qs_ref, ks_ref,
                     q_ref, k_ref, v_ref):
    heads, _, hd = q_ref.shape
    inner = heads * hd

    x = x_ref[...].astype(jnp.float32)                           # (ts, dim)

    # ---- input LayerNorm (f32, VPU/XLU) ----
    mu = jnp.mean(x, axis=-1, keepdims=True)
    var = jnp.mean((x - mu) ** 2, axis=-1, keepdims=True)
    xn = (x - mu) * lax.rsqrt(var + _LN_EPS) * gin_ref[...] + bin_ref[...]

    # ---- ONE lane-dense QKV matmul: bf16 MXU operands, f32 accumulation ----
    qkv = jnp.dot(xn.astype(jnp.bfloat16), wqkv_ref[...],
                  preferred_element_type=jnp.float32)            # (ts, 3*inner)

    # ---- split heads with static lane slices, stack head-major (H, ts, hd) ----
    def head_major(base):
        return jnp.stack([qkv[:, base + h * hd: base + (h + 1) * hd]
                          for h in range(heads)], axis=0)        # (H, ts, hd) f32

    def l2_normalize(t):
        nrm = jnp.sqrt(jnp.sum(t * t, axis=-1, keepdims=True))
        return t * (1.0 / jnp.maximum(nrm, _NRM_EPS))

    # attention `scale` is pre-folded into qs_ref by the wrapper.
    q_ref[...] = (l2_normalize(head_major(0)) * qs_ref[...]).astype(q_ref.dtype)
    k_ref[...] = (l2_normalize(head_major(inner)) * ks_ref[...]).astype(k_ref.dtype)
    v_ref[...] = head_major(2 * inner).astype(v_ref.dtype)


# --------------------------------------------------------------------------------------
# Kernel 2: flash attention (online softmax) + output projection + output LayerNorm
# --------------------------------------------------------------------------------------
def _flash_attn_kernel(q_ref, k_ref, v_ref, wo_ref, gout_ref, bout_ref,
                       o_ref, m_sc, l_sc, acc_sc):
    heads = q_ref.shape[0]
    ki = pl.program_id(2)

    @pl.when(ki == 0)
    def _init():
        m_sc[...] = jnp.full_like(m_sc, -jnp.inf)
        l_sc[...] = jnp.zeros_like(l_sc)
        acc_sc[...] = jnp.zeros_like(acc_sc)

    # Scores (H, tq, tk): bf16 operands, f32 accumulation; `scale` already in q.
    s = lax.dot_general(q_ref[...], k_ref[...], (((2,), (2,)), ((0,), (0,))),
                        preferred_element_type=jnp.float32)

    m_prev = m_sc[...]
    m_new = jnp.maximum(m_prev, jnp.max(s, axis=-1, keepdims=True))
    alpha = jnp.exp(m_prev - m_new)
    p = jnp.exp(s - m_new)
    l_sc[...] = alpha * l_sc[...] + jnp.sum(p, axis=-1, keepdims=True)
    pv = lax.dot_general(p.astype(jnp.bfloat16), v_ref[...],
                         (((2,), (1,)), ((0,), (0,))),
                         preferred_element_type=jnp.float32)     # (H, tq, d)
    acc_sc[...] = alpha * acc_sc[...] + pv
    m_sc[...] = m_new

    @pl.when(ki == pl.num_programs(2) - 1)
    def _finalize():
        # Fold softmax normalization into the small (H, tq, d) accumulator (EUP recip),
        # never into the (H, tq, tk) probability matrix.
        inv_l = pl.reciprocal(l_sc[...], approx=True)
        attn = (acc_sc[...] * inv_l).astype(jnp.bfloat16)        # (H, tq, d)
        # Lane-concatenate heads -> (tq, inner); ONE deep-K output projection.
        attn_flat = jnp.concatenate([attn[h] for h in range(heads)], axis=-1)
        out = jnp.dot(attn_flat, wo_ref[...], preferred_element_type=jnp.float32)
        # ---- output LayerNorm (f32) ----
        mu = jnp.mean(out, axis=-1, keepdims=True)
        var = jnp.mean((out - mu) ** 2, axis=-1, keepdims=True)
        out = (out - mu) * lax.rsqrt(var + _LN_EPS)
        o_ref[...] = (out * gout_ref[...] + bout_ref[...]).astype(o_ref.dtype)


# --------------------------------------------------------------------------------------
# Tile / VMEM sizing helpers
# --------------------------------------------------------------------------------------
def _pick_tile(n, preferred):
    t = min(preferred, n)
    t -= t % 8
    while t >= 8:
        if n % t == 0:
            return t
        t -= 8
    return n  # full extent is always a legal block dim


def _vmem_limit_bytes():
    cap = 64 * 1024 * 1024  # conservative default (v7x per-core physical VMEM)
    try:
        cap = int(pltpu.get_tpu_info().vmem_capacity_bytes)
    except Exception:
        pass
    # ~25% headroom under physical VMEM; never request more than ~112 MiB.
    return max(32 * 1024 * 1024, min((cap * 3) // 4, 112 * 1024 * 1024))


def _kernel2_vmem_bytes(heads, head_dim, dim, tq, tk, out_itemsize, single_buf_w):
    inner = heads * head_dim
    w_bufs = 1 if single_buf_w else 2
    b = 2 * heads * tq * head_dim * 2            # q tile (bf16, double-buffered)
    b += 2 * 2 * heads * tk * head_dim * 2       # k + v tiles
    b += w_bufs * inner * dim * 2                # wo (bf16)
    b += 2 * tq * dim * out_itemsize             # output tile
    b += heads * tq * (head_dim + 2) * 4         # f32 scratch (m, l, acc)
    b += 2 * heads * tq * tk * 4                 # s / p f32 temporaries
    return b


def _fit_attn_tiles(n, heads, head_dim, dim, out_itemsize, vmem_limit, single_buf_w):
    tq, tk = _pick_tile(n, 512), _pick_tile(n, 256)
    budget = int(0.7 * vmem_limit)
    while _kernel2_vmem_bytes(heads, head_dim, dim, tq, tk,
                              out_itemsize, single_buf_w) > budget:
        cur, is_q = (tq, True) if tq >= tk else (tk, False)
        new = _pick_tile(n, cur // 2)
        if new >= cur:
            break
        if is_q:
            tq = new
        else:
            tk = new
    return tq, tk


# --------------------------------------------------------------------------------------
# Wrapper
# --------------------------------------------------------------------------------------
def self_attention(x, params, *, heads, head_dim, scale,
                   seq_tile=None, q_tile=None, kv_tile=None,
                   single_buffer_weights=True):
    """x: (B, N, dim) float32. Returns (B, N, dim)."""
    B, N, dim = x.shape
    inner = heads * head_dim
    f32, bf16 = jnp.float32, jnp.bfloat16

    vmem_limit = _vmem_limit_bytes()
    auto_tq, auto_tk = _fit_attn_tiles(N, heads, head_dim, dim, x.dtype.itemsize,
                                       vmem_limit, single_buffer_weights)
    ts = seq_tile if seq_tile is not None else _pick_tile(N, 512)
    tq = q_tile if q_tile is not None else auto_tq
    tk = kv_tile if kv_tile is not None else auto_tk
    for t in (ts, tq, tk):
        assert N % t == 0, f"tile {t} must divide N={N}"
        assert t == N or t % 8 == 0, f"tile {t} must be a multiple of 8 (or the full N)"
    # NOTE: for good v7x megacore balance keep B * (N // tq) and B * (N // ts) even.

    # ---- wrapper-side weight / param prep (lane-dense, bf16 MXU operands) ----
    wq = params["wq"]                    # (inner, dim)
    wkv = params["wkv"]                  # (2*inner, dim)
    # concatenated QKV weight: (dim, 3*inner), columns ordered q | k | v, h*head_dim+d
    w_qkv = jnp.concatenate([wq.T, wkv[:inner].T, wkv[inner:].T], axis=1).astype(bf16)
    wo2 = params["wo"].T.astype(bf16)    # (inner, dim); rows ordered h*head_dim+d

    g_in = params["ln_in_g"].reshape(1, dim).astype(f32)
    b_in = params["ln_in_b"].reshape(1, dim).astype(f32)
    g_out = params["ln_out_g"].reshape(1, dim).astype(f32)
    b_out = params["ln_out_b"].reshape(1, dim).astype(f32)
    # Fold the attention `scale` into the (post-normalization) q scale so the O(N^2)
    # score matrix is never multiplied by a scalar.
    qs_eff = (params["q_scale"].astype(f32) * scale).reshape(1, 1, head_dim)
    ks = params["k_scale"].astype(f32).reshape(1, 1, head_dim)

    def const_spec(shape):
        # Constant-index operands: single-buffer to reclaim VMEM (decisive on v7x).
        zeros = (0,) * len(shape)
        if single_buffer_weights and hasattr(pl, "Buffered"):
            return pl.BlockSpec(shape, lambda *_: zeros, pipeline_mode=pl.Buffered(1))
        return pl.BlockSpec(shape, lambda *_: zeros)

    qkv_shape = jax.ShapeDtypeStruct((B, heads, N, head_dim), bf16)
    qkv_out_spec = pl.BlockSpec((None, heads, ts, head_dim), lambda b, s: (b, 0, s, 0))

    # ---- kernel 1: input LayerNorm + single fused QKV projection ----
    q, k, v = pl.pallas_call(
        _qkv_proj_kernel,
        out_shape=(qkv_shape, qkv_shape, qkv_shape),
        grid_spec=pltpu.PrefetchScalarGridSpec(
            num_scalar_prefetch=0,
            grid=(B, N // ts),
            in_specs=[
                pl.BlockSpec((None, ts, dim), lambda b, s: (b, s, 0)),
                const_spec((dim, 3 * inner)),
                const_spec((1, dim)),
                const_spec((1, dim)),
                const_spec((1, 1, head_dim)),
                const_spec((1, 1, head_dim)),
            ],
            out_specs=(qkv_out_spec, qkv_out_spec, qkv_out_spec),
        ),
        compiler_params=pltpu.CompilerParams(
            dimension_semantics=("parallel", "parallel"),
            vmem_limit_bytes=vmem_limit),
    )(x, w_qkv, g_in, b_in, qs_eff, ks)

    # ---- kernel 2: flash attention + output projection + output LayerNorm ----
    # kv axis must stay innermost and "arbitrary" for the online-softmax scratch.
    out = pl.pallas_call(
        _flash_attn_kernel,
        out_shape=jax.ShapeDtypeStruct((B, N, dim), x.dtype),
        grid_spec=pltpu.PrefetchScalarGridSpec(
            num_scalar_prefetch=0,
            grid=(B, N // tq, N // tk),
            in_specs=[
                pl.BlockSpec((None, heads, tq, head_dim), lambda b, qi, ki: (b, 0, qi, 0)),
                pl.BlockSpec((None, heads, tk, head_dim), lambda b, qi, ki: (b, 0, ki, 0)),
                pl.BlockSpec((None, heads, tk, head_dim), lambda b, qi, ki: (b, 0, ki, 0)),
                const_spec((inner, dim)),
                const_spec((1, dim)),
                const_spec((1, dim)),
            ],
            out_specs=pl.BlockSpec((None, tq, dim), lambda b, qi, ki: (b, qi, 0)),
            scratch_shapes=[
                pltpu.VMEM((heads, tq, 1), jnp.float32),         # running max
                pltpu.VMEM((heads, tq, 1), jnp.float32),         # running denom
                pltpu.VMEM((heads, tq, head_dim), jnp.float32),  # output accumulator
            ],
        ),
        compiler_params=pltpu.CompilerParams(
            dimension_semantics=("parallel", "parallel", "arbitrary"),
            vmem_limit_bytes=vmem_limit),
    )(q, k, v, wo2, g_out, b_out)
    return out


# --------------------------------------------------------------------------------------
# Pure-JAX reference (PyTorch semantics, with the same bf16 matmul-operand cast points
# as the kernels so the comparison isolates kernel logic from bf16 rounding).
# --------------------------------------------------------------------------------------
def _reference(x, params, *, heads, head_dim, scale):
    f32, bf16 = jnp.float32, jnp.bfloat16
    B, N, dim = x.shape
    inner = heads * head_dim

    def ln(t, g, b):
        mu = jnp.mean(t, -1, keepdims=True)
        var = jnp.mean((t - mu) ** 2, -1, keepdims=True)
        return (t - mu) * lax.rsqrt(var + _LN_EPS) * g + b

    def l2n(t):
        n = jnp.sqrt(jnp.sum(t * t, -1, keepdims=True))
        return t * (1.0 / jnp.maximum(n, _NRM_EPS))

    xn = ln(x.astype(f32), params["ln_in_g"], params["ln_in_b"])
    xb = xn.astype(bf16)

    wq = params["wq"].reshape(heads, head_dim, dim).transpose(0, 2, 1).astype(bf16)
    wk = params["wkv"][:inner].reshape(heads, head_dim, dim).transpose(0, 2, 1).astype(bf16)
    wv = params["wkv"][inner:].reshape(heads, head_dim, dim).transpose(0, 2, 1).astype(bf16)
    wo = params["wo"].T.reshape(heads, head_dim, dim).astype(bf16)

    q = jnp.einsum("bnc,hcd->bhnd", xb, wq, preferred_element_type=f32)
    k = jnp.einsum("bnc,hcd->bhnd", xb, wk, preferred_element_type=f32)
    v = jnp.einsum("bnc,hcd->bhnd", xb, wv, preferred_element_type=f32)

    qb = (l2n(q) * (params["q_scale"] * scale)).astype(bf16)
    kb = (l2n(k) * params["k_scale"]).astype(bf16)
    vb = v.astype(bf16)

    s = jnp.einsum("bhqd,bhkd->bhqk", qb, kb, preferred_element_type=f32)
    m = jnp.max(s, -1, keepdims=True)
    p = jnp.exp(s - m)
    l = jnp.sum(p, -1, keepdims=True)
    pv = jnp.einsum("bhqk,bhkd->bhqd", p.astype(bf16), vb, preferred_element_type=f32)
    attn = (pv / l).astype(bf16)

    out = jnp.einsum("bhnd,hdc->bnc", attn, wo, preferred_element_type=f32)
    return ln(out, params["ln_out_g"], params["ln_out_b"])


if __name__ == "__main__":
    B, N, dim = 2, 32, 32
    heads, head_dim, scale = 2, 16, 8
    inner = heads * head_dim

    key = jax.random.PRNGKey(0)
    kx, kq, kkv, ko, k1, k2, k3, k4, k5, k6 = jax.random.split(key, 10)

    x = jax.random.normal(kx, (B, N, dim), dtype=jnp.float32)
    params = {
        "wq": jax.random.normal(kq, (inner, dim), jnp.float32) * 0.05,
        "wkv": jax.random.normal(kkv, (2 * inner, dim), jnp.float32) * 0.05,
        "wo": jax.random.normal(ko, (dim, inner), jnp.float32) * 0.05,
        "ln_in_g": 1.0 + 0.1 * jax.random.normal(k1, (dim,), jnp.float32),
        "ln_in_b": 0.05 * jax.random.normal(k2, (dim,), jnp.float32),
        "ln_out_g": 1.0 + 0.1 * jax.random.normal(k3, (dim,), jnp.float32),
        "ln_out_b": 0.05 * jax.random.normal(k4, (dim,), jnp.float32),
        "q_scale": 1.0 + 0.1 * jax.random.normal(k5, (head_dim,), jnp.float32),
        "k_scale": 1.0 + 0.1 * jax.random.normal(k6, (head_dim,), jnp.float32),
    }

    # Force 16-token tiles so the multi-tile online-softmax / accumulator path is exercised.
    kwargs = dict(heads=heads, head_dim=head_dim, scale=float(scale),
                  seq_tile=16, q_tile=16, kv_tile=16)
    try:
        out = jax.block_until_ready(self_attention(x, params, **kwargs))
    except Exception:
        # Fallback: this Mosaic build rejected pl.Buffered(1) single-buffering of the
        # constant-index weights; rerun with default (double-buffered) BlockSpecs.
        out = jax.block_until_ready(
            self_attention(x, params, single_buffer_weights=False, **kwargs))

    ref = _reference(x, params, heads=heads, head_dim=head_dim, scale=float(scale))
    assert out.shape == (B, N, dim)
    max_err = float(jnp.max(jnp.abs(out - ref)))
    assert jnp.allclose(out, ref, atol=2e-2, rtol=2e-2), \
        f"mismatch vs reference (max abs err {max_err})"

    print("KERNEL_OK")
</pallas_src>

<mosaic_0001>
module attributes {stable_mosaic.version = 11 : i64} {
  func.func @_qkv_proj_kernel(%arg0: i32, %arg1: i32, %arg2: memref<1x16x32xf32, #tpu.memory_space<vmem>>, %arg3: memref<32x96xbf16, #tpu.memory_space<vmem>>, %arg4: memref<1x32xf32, #tpu.memory_space<vmem>>, %arg5: memref<1x32xf32, #tpu.memory_space<vmem>>, %arg6: memref<1x1x16xf32, #tpu.memory_space<vmem>>, %arg7: memref<1x1x16xf32, #tpu.memory_space<vmem>>, %arg8: memref<1x2x16x16xbf16, #tpu.memory_space<vmem>>, %arg9: memref<1x2x16x16xbf16, #tpu.memory_space<vmem>>, %arg10: memref<1x2x16x16xbf16, #tpu.memory_space<vmem>>) attributes {dimension_semantics = [#tpu.dimension_semantics<parallel>, #tpu.dimension_semantics<parallel>], iteration_bounds = array<i64: 2, 2>, scalar_prefetch = 0 : i64, scratch_operands = 0 : i64, tpu.core_type = #tpu.core_type<tc>, window_params = [{transform_indices = @transform_0, window_bounds = array<i64: 1, 16, 32>}, {pipeline_mode = #tpu.pipeline_mode<synchronous>, transform_indices = @transform_1, window_bounds = array<i64: 32, 96>}, {pipeline_mode = #tpu.pipeline_mode<synchronous>, transform_indices = @transform_2, window_bounds = array<i64: 1, 32>}, {pipeline_mode = #tpu.pipeline_mode<synchronous>, transform_indices = @transform_3, window_bounds = array<i64: 1, 32>}, {pipeline_mode = #tpu.pipeline_mode<synchronous>, transform_indices = @transform_4, window_bounds = array<i64: 1, 1, 16>}, {pipeline_mode = #tpu.pipeline_mode<synchronous>, transform_indices = @transform_5, window_bounds = array<i64: 1, 1, 16>}, {transform_indices = @transform_6, window_bounds = array<i64: 1, 2, 16, 16>}, {transform_indices = @transform_7, window_bounds = array<i64: 1, 2, 16, 16>}, {transform_indices = @transform_8, window_bounds = array<i64: 1, 2, 16, 16>}]} {
    %c0 = arith.constant 0 : index
    %c0_0 = arith.constant 0 : index
    %c0_1 = arith.constant 0 : index
    %0 = vector.load %arg2[%c0, %c0_0, %c0_1] : memref<1x16x32xf32, #tpu.memory_space<vmem>>, vector<1x16x32xf32>
    %1 = vector.shape_cast %0 : vector<1x16x32xf32> to vector<16x32xf32>
    %cst = arith.constant dense<0.000000e+00> : vector<16xf32>
    %2 = vector.multi_reduction <add>, %1, %cst [1] : vector<16x32xf32> to vector<16xf32>
    %3 = vector.shape_cast %2 : vector<16xf32> to vector<16x1xf32>
    %cst_2 = arith.constant 3.200000e+01 : f32
    %4 = vector.broadcast %cst_2 : f32 to vector<16x1xf32>
    %5 = arith.divf %3, %4 : vector<16x1xf32>
    %6 = vector.broadcast %5 : vector<16x1xf32> to vector<16x32xf32>
    %7 = arith.subf %1, %6 : vector<16x32xf32>
    %8 = arith.mulf %7, %7 : vector<16x32xf32>
    %cst_3 = arith.constant dense<0.000000e+00> : vector<16xf32>
    %9 = vector.multi_reduction <add>, %8, %cst_3 [1] : vector<16x32xf32> to vector<16xf32>
    %10 = vector.shape_cast %9 : vector<16xf32> to vector<16x1xf32>
    %cst_4 = arith.constant 3.200000e+01 : f32
    %11 = vector.broadcast %cst_4 : f32 to vector<16x1xf32>
    %12 = arith.divf %10, %11 : vector<16x1xf32>
    %13 = vector.broadcast %5 : vector<16x1xf32> to vector<16x32xf32>
    %14 = arith.subf %1, %13 : vector<16x32xf32>
    %cst_5 = arith.constant 9.99999974E-6 : f32
    %15 = vector.broadcast %cst_5 : f32 to vector<16x1xf32>
    %16 = arith.addf %12, %15 : vector<16x1xf32>
    %17 = math.rsqrt %16 : vector<16x1xf32>
    %18 = vector.broadcast %17 : vector<16x1xf32> to vector<16x32xf32>
    %19 = arith.mulf %14, %18 : vector<16x32xf32>
    %c0_6 = arith.constant 0 : index
    %c0_7 = arith.constant 0 : index
    %20 = vector.load %arg4[%c0_6, %c0_7] : memref<1x32xf32, #tpu.memory_space<vmem>>, vector<1x32xf32>
    %21 = vector.broadcast %20 : vector<1x32xf32> to vector<16x32xf32>
    %22 = arith.mulf %19, %21 : vector<16x32xf32>
    %c0_8 = arith.constant 0 : index
    %c0_9 = arith.constant 0 : index
    %23 = vector.load %arg5[%c0_8, %c0_9] : memref<1x32xf32, #tpu.memory_space<vmem>>, vector<1x32xf32>
    %24 = vector.broadcast %23 : vector<1x32xf32> to vector<16x32xf32>
    %25 = arith.addf %22, %24 : vector<16x32xf32>
    %26 = arith.truncf %25 : vector<16x32xf32> to vector<16x32xbf16>
    %c0_10 = arith.constant 0 : index
    %c0_11 = arith.constant 0 : index
    %27 = vector.load %arg3[%c0_10, %c0_11] : memref<32x96xbf16, #tpu.memory_space<vmem>>, vector<32x96xbf16>
    %cst_12 = arith.constant dense<0.000000e+00> : vector<16x96xf32>
    %28 = tpu.matmul %26, %27, %cst_12 {dimension_numbers = #tpu.dot_dimension_numbers<[1], [0], [0], [1], [0, 0, 1, 1], [], []>} : vector<16x32xbf16>, vector<32x96xbf16>, vector<16x96xf32> -> vector<16x96xf32>
    %29 = vector.extract_strided_slice %28 {offsets = [0, 0], sizes = [16, 16], strides = [1, 1]} : vector<16x96xf32> to vector<16x16xf32>
    %30 = vector.extract_strided_slice %28 {offsets = [0, 16], sizes = [16, 16], strides = [1, 1]} : vector<16x96xf32> to vector<16x16xf32>
    %31 = vector.shape_cast %29 : vector<16x16xf32> to vector<1x16x16xf32>
    %32 = vector.shape_cast %30 : vector<16x16xf32> to vector<1x16x16xf32>
    %33 = tpu.concatenate %31, %32 in 0 : vector<1x16x16xf32>, vector<1x16x16xf32> -> vector<2x16x16xf32>
    %34 = arith.mulf %33, %33 : vector<2x16x16xf32>
    %cst_13 = arith.constant dense<0.000000e+00> : vector<2x16xf32>
    %35 = vector.multi_reduction <add>, %34, %cst_13 [2] : vector<2x16x16xf32> to vector<2x16xf32>
    %36 = vector.shape_cast %35 : vector<2x16xf32> to vector<2x16x1xf32>
    %37 = math.sqrt %36 : vector<2x16x1xf32>
    %cst_14 = arith.constant 9.99999996E-13 : f32
    %38 = vector.broadcast %cst_14 : f32 to vector<2x16x1xf32>
    %39 = arith.maximumf %37, %38 : vector<2x16x1xf32>
    %cst_15 = arith.constant 1.000000e+00 : f32
    %40 = vector.broadcast %cst_15 : f32 to vector<2x16x1xf32>
    %41 = arith.divf %40, %39 : vector<2x16x1xf32>
    %42 = vector.broadcast %41 : vector<2x16x1xf32> to vector<2x16x16xf32>
    %43 = arith.mulf %33, %42 : vector<2x16x16xf32>
    %c0_16 = arith.constant 0 : index
    %c0_17 = arith.constant 0 : index
    %c0_18 = arith.constant 0 : index
    %44 = vector.load %arg6[%c0_16, %c0_17, %c0_18] : memref<1x1x16xf32, #tpu.memory_space<vmem>>, vector<1x1x16xf32>
    %45 = vector.broadcast %44 : vector<1x1x16xf32> to vector<2x16x16xf32>
    %46 = arith.mulf %43, %45 : vector<2x16x16xf32>
    %47 = arith.truncf %46 : vector<2x16x16xf32> to vector<2x16x16xbf16>
    %c0_19 = arith.constant 0 : index
    %c0_20 = arith.constant 0 : index
    %c0_21 = arith.constant 0 : index
    %c0_22 = arith.constant 0 : index
    %48 = vector.load %arg8[%c0_19, %c0_20, %c0_21, %c0_22] : memref<1x2x16x16xbf16, #tpu.memory_space<vmem>>, vector<1x2x16x16xbf16>
    %49 = vector.shape_cast %48 : vector<1x2x16x16xbf16> to vector<2x16x16xbf16>
    %50 = vector.shape_cast %47 : vector<2x16x16xbf16> to vector<1x2x16x16xbf16>
    tpu.vector_store %arg8[%c0_19, %c0_20, %c0_21, %c0_22], %50 {strides = array<i32>} : memref<1x2x16x16xbf16, #tpu.memory_space<vmem>>, vector<1x2x16x16xbf16>,
    %51 = vector.extract_strided_slice %28 {offsets = [0, 32], sizes = [16, 16], strides = [1, 1]} : vector<16x96xf32> to vector<16x16xf32>
    %52 = vector.extract_strided_slice %28 {offsets = [0, 48], sizes = [16, 16], strides = [1, 1]} : vector<16x96xf32> to vector<16x16xf32>
    %53 = vector.shape_cast %51 : vector<16x16xf32> to vector<1x16x16xf32>
    %54 = vector.shape_cast %52 : vector<16x16xf32> to vector<1x16x16xf32>
    %55 = tpu.concatenate %53, %54 in 0 : vector<1x16x16xf32>, vector<1x16x16xf32> -> vector<2x16x16xf32>
    %56 = arith.mulf %55, %55 : vector<2x16x16xf32>
    %cst_23 = arith.constant dense<0.000000e+00> : vector<2x16xf32>
    %57 = vector.multi_reduction <add>, %56, %cst_23 [2] : vector<2x16x16xf32> to vector<2x16xf32>
    %58 = vector.shape_cast %57 : vector<2x16xf32> to vector<2x16x1xf32>
    %59 = math.sqrt %58 : vector<2x16x1xf32>
    %cst_24 = arith.constant 9.99999996E-13 : f32
    %60 = vector.broadcast %cst_24 : f32 to vector<2x16x1xf32>
    %61 = arith.maximumf %59, %60 : vector<2x16x1xf32>
    %cst_25 = arith.constant 1.000000e+00 : f32
    %62 = vector.broadcast %cst_25 : f32 to vector<2x16x1xf32>
    %63 = arith.divf %62, %61 : vector<2x16x1xf32>
    %64 = vector.broadcast %63 : vector<2x16x1xf32> to vector<2x16x16xf32>
    %65 = arith.mulf %55, %64 : vector<2x16x16xf32>
    %c0_26 = arith.constant 0 : index
    %c0_27 = arith.constant 0 : index
    %c0_28 = arith.constant 0 : index
    %66 = vector.load %arg7[%c0_26, %c0_27, %c0_28] : memref<1x1x16xf32, #tpu.memory_space<vmem>>, vector<1x1x16xf32>
    %67 = vector.broadcast %66 : vector<1x1x16xf32> to vector<2x16x16xf32>
    %68 = arith.mulf %65, %67 : vector<2x16x16xf32>
    %69 = arith.truncf %68 : vector<2x16x16xf32> to vector<2x16x16xbf16>
    %c0_29 = arith.constant 0 : index
    %c0_30 = arith.constant 0 : index
    %c0_31 = arith.constant 0 : index
    %c0_32 = arith.constant 0 : index
    %70 = vector.load %arg9[%c0_29, %c0_30, %c0_31, %c0_32] : memref<1x2x16x16xbf16, #tpu.memory_space<vmem>>, vector<1x2x16x16xbf16>
    %71 = vector.shape_cast %70 : vector<1x2x16x16xbf16> to vector<2x16x16xbf16>
    %72 = vector.shape_cast %69 : vector<2x16x16xbf16> to vector<1x2x16x16xbf16>
    tpu.vector_store %arg9[%c0_29, %c0_30, %c0_31, %c0_32], %72 {strides = array<i32>} : memref<1x2x16x16xbf16, #tpu.memory_space<vmem>>, vector<1x2x16x16xbf16>,
    %73 = vector.extract_strided_slice %28 {offsets = [0, 64], sizes = [16, 16], strides = [1, 1]} : vector<16x96xf32> to vector<16x16xf32>
    %74 = vector.extract_strided_slice %28 {offsets = [0, 80], sizes = [16, 16], strides = [1, 1]} : vector<16x96xf32> to vector<16x16xf32>
    %75 = vector.shape_cast %73 : vector<16x16xf32> to vector<1x16x16xf32>
    %76 = vector.shape_cast %74 : vector<16x16xf32> to vector<1x16x16xf32>
    %77 = tpu.concatenate %75, %76 in 0 : vector<1x16x16xf32>, vector<1x16x16xf32> -> vector<2x16x16xf32>
    %78 = arith.truncf %77 : vector<2x16x16xf32> to vector<2x16x16xbf16>
    %c0_33 = arith.constant 0 : index
    %c0_34 = arith.constant 0 : index
    %c0_35 = arith.constant 0 : index
    %c0_36 = arith.constant 0 : index
    %79 = vector.load %arg10[%c0_33, %c0_34, %c0_35, %c0_36] : memref<1x2x16x16xbf16, #tpu.memory_space<vmem>>, vector<1x2x16x16xbf16>
    %80 = vector.shape_cast %79 : vector<1x2x16x16xbf16> to vector<2x16x16xbf16>
    %81 = vector.shape_cast %78 : vector<2x16x16xbf16> to vector<1x2x16x16xbf16>
    tpu.vector_store %arg10[%c0_33, %c0_34, %c0_35, %c0_36], %81 {strides = array<i32>} : memref<1x2x16x16xbf16, #tpu.memory_space<vmem>>, vector<1x2x16x16xbf16>,
    return
  }
  func.func @transform_0(%arg0: i32, %arg1: i32) -> (i32, i32, i32) {
    %c0_i32 = arith.constant 0 : i32
    %c0_i32_0 = arith.constant 0 : i32
    return %arg0, %arg1, %c0_i32 : i32, i32, i32
  }
  func.func @transform_1(%arg0: i32, %arg1: i32) -> (i32, i32) {
    %c0_i32 = arith.constant 0 : i32
    %c0_i32_0 = arith.constant 0 : i32
    %c0_i32_1 = arith.constant 0 : i32
    return %c0_i32, %c0_i32_0 : i32, i32
  }
  func.func @transform_2(%arg0: i32, %arg1: i32) -> (i32, i32) {
    %c0_i32 = arith.constant 0 : i32
    %c0_i32_0 = arith.constant 0 : i32
    %c0_i32_1 = arith.constant 0 : i32
    return %c0_i32, %c0_i32_0 : i32, i32
  }
  func.func @transform_3(%arg0: i32, %arg1: i32) -> (i32, i32) {
    %c0_i32 = arith.constant 0 : i32
    %c0_i32_0 = arith.constant 0 : i32
    %c0_i32_1 = arith.constant 0 : i32
    return %c0_i32, %c0_i32_0 : i32, i32
  }
  func.func @transform_4(%arg0: i32, %arg1: i32) -> (i32, i32, i32) {
    %c0_i32 = arith.constant 0 : i32
    %c0_i32_0 = arith.constant 0 : i32
    %c0_i32_1 = arith.constant 0 : i32
    %c0_i32_2 = arith.constant 0 : i32
    return %c0_i32, %c0_i32_0, %c0_i32_1 : i32, i32, i32
  }
  func.func @transform_5(%arg0: i32, %arg1: i32) -> (i32, i32, i32) {
    %c0_i32 = arith.constant 0 : i32
    %c0_i32_0 = arith.constant 0 : i32
    %c0_i32_1 = arith.constant 0 : i32
    %c0_i32_2 = arith.constant 0 : i32
    return %c0_i32, %c0_i32_0, %c0_i32_1 : i32, i32, i32
  }
  func.func @transform_6(%arg0: i32, %arg1: i32) -> (i32, i32, i32, i32) {
    %c0_i32 = arith.constant 0 : i32
    %c0_i32_0 = arith.constant 0 : i32
    %c0_i32_1 = arith.constant 0 : i32
    return %arg0, %c0_i32, %arg1, %c0_i32_0 : i32, i32, i32, i32
  }
  func.func @transform_7(%arg0: i32, %arg1: i32) -> (i32, i32, i32, i32) {
    %c0_i32 = arith.constant 0 : i32
    %c0_i32_0 = arith.constant 0 : i32
    %c0_i32_1 = arith.constant 0 : i32
    return %arg0, %c0_i32, %arg1, %c0_i32_0 : i32, i32, i32, i32
  }
  func.func @transform_8(%arg0: i32, %arg1: i32) -> (i32, i32, i32, i32) {
    %c0_i32 = arith.constant 0 : i32
    %c0_i32_0 = arith.constant 0 : i32
    %c0_i32_1 = arith.constant 0 : i32
    return %arg0, %c0_i32, %arg1, %c0_i32_0 : i32, i32, i32, i32
  }
}

module attributes {stable_mosaic.version = 11 : i64} {
  func.func @_qkv_proj_kernel(%arg0: i32, %arg1: i32, %arg2: memref<1x16x32xf32, #tpu.memory_space<vmem>>, %arg3: memref<32x96xbf16, #tpu.memory_space<vmem>>, %arg4: memref<1x32xf32, #tpu.memory_space<vmem>>, %arg5: memref<1x32xf32, #tpu.memory_space<vmem>>, %arg6: memref<1x1x16xf32, #tpu.memory_space<vmem>>, %arg7: memref<1x1x16xf32, #tpu.memory_space<vmem>>, %arg8: memref<1x2x16x16xbf16, #tpu.memory_space<vmem>>, %arg9: memref<1x2x16x16xbf16, #tpu.memory_space<vmem>>, %arg10: memref<1x2x16x16xbf16, #tpu.memory_space<vmem>>) attributes {dimension_semantics = [#tpu.dimension_semantics<parallel>, #tpu.dimension_semantics<parallel>], iteration_bounds = array<i64: 2, 2>, scalar_prefetch = 0 : i64, scratch_operands = 0 : i64, tpu.core_type = #tpu.core_type<tc>, window_params = [{transform_indices = @transform_0, window_bounds = array<i64: 1, 16, 32>}, {pipeline_mode = #tpu.pipeline_mode<synchronous>, transform_indices = @transform_1, window_bounds = array<i64: 32, 96>}, {pipeline_mode = #tpu.pipeline_mode<synchronous>, transform_indices = @transform_2, window_bounds = array<i64: 1, 32>}, {pipeline_mode = #tpu.pipeline_mode<synchronous>, transform_indices = @transform_3, window_bounds = array<i64: 1, 32>}, {pipeline_mode = #tpu.pipeline_mode<synchronous>, transform_indices = @transform_4, window_bounds = array<i64: 1, 1, 16>}, {pipeline_mode = #tpu.pipeline_mode<synchronous>, transform_indices = @transform_5, window_bounds = array<i64: 1, 1, 16>}, {transform_indices = @transform_6, window_bounds = array<i64: 1, 2, 16, 16>}, {transform_indices = @transform_7, window_bounds = array<i64: 1, 2, 16, 16>}, {transform_indices = @transform_8, window_bounds = array<i64: 1, 2, 16, 16>}]} {
    %c0 = arith.constant 0 : index
    %c0_0 = arith.constant 0 : index
    %c0_1 = arith.constant 0 : index
    %0 = vector.load %arg2[%c0, %c0_0, %c0_1] : memref<1x16x32xf32, #tpu.memory_space<vmem>>, vector<1x16x32xf32>
    %1 = vector.shape_cast %0 : vector<1x16x32xf32> to vector<16x32xf32>
    %cst = arith.constant dense<0.000000e+00> : vector<16xf32>
    %2 = vector.multi_reduction <add>, %1, %cst [1] : vector<16x32xf32> to vector<16xf32>
    %3 = vector.shape_cast %2 : vector<16xf32> to vector<16x1xf32>
    %cst_2 = arith.constant 3.200000e+01 : f32
    %4 = vector.broadcast %cst_2 : f32 to vector<16x1xf32>
    %5 = arith.divf %3, %4 : vector<16x1xf32>
    %6 = vector.broadcast %5 : vector<16x1xf32> to vector<16x32xf32>
    %7 = arith.subf %1, %6 : vector<16x32xf32>
    %8 = arith.mulf %7, %7 : vector<16x32xf32>
    %cst_3 = arith.constant dense<0.000000e+00> : vector<16xf32>
    %9 = vector.multi_reduction <add>, %8, %cst_3 [1] : vector<16x32xf32> to vector<16xf32>
    %10 = vector.shape_cast %9 : vector<16xf32> to vector<16x1xf32>
    %cst_4 = arith.constant 3.200000e+01 : f32
    %11 = vector.broadcast %cst_4 : f32 to vector<16x1xf32>
    %12 = arith.divf %10, %11 : vector<16x1xf32>
    %13 = vector.broadcast %5 : vector<16x1xf32> to vector<16x32xf32>
    %14 = arith.subf %1, %13 : vector<16x32xf32>
    %cst_5 = arith.constant 9.99999974E-6 : f32
    %15 = vector.broadcast %cst_5 : f32 to vector<16x1xf32>
    %16 = arith.addf %12, %15 : vector<16x1xf32>
    %17 = math.rsqrt %16 : vector<16x1xf32>
    %18 = vector.broadcast %17 : vector<16x1xf32> to vector<16x32xf32>
    %19 = arith.mulf %14, %18 : vector<16x32xf32>
    %c0_6 = arith.constant 0 : index
    %c0_7 = arith.constant 0 : index
    %20 = vector.load %arg4[%c0_6, %c0_7] : memref<1x32xf32, #tpu.memory_space<vmem>>, vector<1x32xf32>
    %21 = vector.broadcast %20 : vector<1x32xf32> to vector<16x32xf32>
    %22 = arith.mulf %19, %21 : vector<16x32xf32>
    %c0_8 = arith.constant 0 : index
    %c0_9 = arith.constant 0 : index
    %23 = vector.load %arg5[%c0_8, %c0_9] : memref<1x32xf32, #tpu.memory_space<vmem>>, vector<1x32xf32>
    %24 = vector.broadcast %23 : vector<1x32xf32> to vector<16x32xf32>
    %25 = arith.addf %22, %24 : vector<16x32xf32>
    %26 = arith.truncf %25 : vector<16x32xf32> to vector<16x32xbf16>
    %c0_10 = arith.constant 0 : index
    %c0_11 = arith.constant 0 : index
    %27 = vector.load %arg3[%c0_10, %c0_11] : memref<32x96xbf16, #tpu.memory_space<vmem>>, vector<32x96xbf16>
    %cst_12 = arith.constant dense<0.000000e+00> : vector<16x96xf32>
    %28 = tpu.matmul %26, %27, %cst_12 {dimension_numbers = #tpu.dot_dimension_numbers<[1], [0], [0], [1], [0, 0, 1, 1], [], []>} : vector<16x32xbf16>, vector<32x96xbf16>, vector<16x96xf32> -> vector<16x96xf32>
    %29 = vector.extract_strided_slice %28 {offsets = [0, 0], sizes = [16, 16], strides = [1, 1]} : vector<16x96xf32> to vector<16x16xf32>
    %30 = vector.extract_strided_slice %28 {offsets = [0, 16], sizes = [16, 16], strides = [1, 1]} : vector<16x96xf32> to vector<16x16xf32>
    %31 = vector.shape_cast %29 : vector<16x16xf32> to vector<1x16x16xf32>
    %32 = vector.shape_cast %30 : vector<16x16xf32> to vector<1x16x16xf32>
    %33 = tpu.concatenate %31, %32 in 0 : vector<1x16x16xf32>, vector<1x16x16xf32> -> vector<2x16x16xf32>
    %34 = arith.mulf %33, %33 : vector<2x16x16xf32>
    %cst_13 = arith.constant dense<0.000000e+00> : vector<2x16xf32>
    %35 = vector.multi_reduction <add>, %34, %cst_13 [2] : vector<2x16x16xf32> to vector<2x16xf32>
    %36 = vector.shape_cast %35 : vector<2x16xf32> to vector<2x16x1xf32>
    %37 = math.sqrt %36 : vector<2x16x1xf32>
    %cst_14 = arith.constant 9.99999996E-13 : f32
    %38 = vector.broadcast %cst_14 : f32 to vector<2x16x1xf32>
    %39 = arith.maximumf %37, %38 : vector<2x16x1xf32>
    %cst_15 = arith.constant 1.000000e+00 : f32
    %40 = vector.broadcast %cst_15 : f32 to vector<2x16x1xf32>
    %41 = arith.divf %40, %39 : vector<2x16x1xf32>
    %42 = vector.broadcast %41 : vector<2x16x1xf32> to vector<2x16x16xf32>
    %43 = arith.mulf %33, %42 : vector<2x16x16xf32>
    %c0_16 = arith.constant 0 : index
    %c0_17 = arith.constant 0 : index
    %c0_18 = arith.constant 0 : index
    %44 = vector.load %arg6[%c0_16, %c0_17, %c0_18] : memref<1x1x16xf32, #tpu.memory_space<vmem>>, vector<1x1x16xf32>
    %45 = vector.broadcast %44 : vector<1x1x16xf32> to vector<2x16x16xf32>
    %46 = arith.mulf %43, %45 : vector<2x16x16xf32>
    %47 = arith.truncf %46 : vector<2x16x16xf32> to vector<2x16x16xbf16>
    %c0_19 = arith.constant 0 : index
    %c0_20 = arith.constant 0 : index
    %c0_21 = arith.constant 0 : index
    %c0_22 = arith.constant 0 : index
    %48 = vector.load %arg8[%c0_19, %c0_20, %c0_21, %c0_22] : memref<1x2x16x16xbf16, #tpu.memory_space<vmem>>, vector<1x2x16x16xbf16>
    %49 = vector.shape_cast %48 : vector<1x2x16x16xbf16> to vector<2x16x16xbf16>
    %50 = vector.shape_cast %47 : vector<2x16x16xbf16> to vector<1x2x16x16xbf16>
    tpu.vector_store %arg8[%c0_19, %c0_20, %c0_21, %c0_22], %50 {strides = array<i32>} : memref<1x2x16x16xbf16, #tpu.memory_space<vmem>>, vector<1x2x16x16xbf16>,
    %51 = vector.extract_strided_slice %28 {offsets = [0, 32], sizes = [16, 16], strides = [1, 1]} : vector<16x96xf32> to vector<16x16xf32>
    %52 = vector.extract_strided_slice %28 {offsets = [0, 48], sizes = [16, 16], strides = [1, 1]} : vector<16x96xf32> to vector<16x16xf32>
    %53 = vector.shape_cast %51 : vector<16x16xf32> to vector<1x16x16xf32>
    %54 = vector.shape_cast %52 : vector<16x16xf32> to vector<1x16x16xf32>
    %55 = tpu.concatenate %53, %54 in 0 : vector<1x16x16xf32>, vector<1x16x16xf32> -> vector<2x16x16xf32>
    %56 = arith.mulf %55, %55 : vector<2x16x16xf32>
    %cst_23 = arith.constant dense<0.000000e+00> : vector<2x16xf32>
    %57 = vector.multi_reduction <add>, %56, %cst_23 [2] : vector<2x16x16xf32> to vector<2x16xf32>
    %58 = vector.shape_cast %57 : vector<2x16xf32> to vector<2x16x1xf32>
    %59 = math.sqrt %58 : vector<2x16x1xf32>
    %cst_24 = arith.constant 9.99999996E-13 : f32
    %60 = vector.broadcast %cst_24 : f32 to vector<2x16x1xf32>
    %61 = arith.maximumf %59, %60 : vector<2x16x1xf32>
    %cst_25 = arith.constant 1.000000e+00 : f32
    %62 = vector.broadcast %cst_25 : f32 to vector<2x16x1xf32>
    %63 = arith.divf %62, %61 : vector<2x16x1xf32>
    %64 = vector.broadcast %63 : vector<2x16x1xf32> to vector<2x16x16xf32>
    %65 = arith.mulf %55, %64 : vector<2x16x16xf32>
    %c0_26 = arith.constant 0 : index
    %c0_27 = arith.constant 0 : index
    %c0_28 = arith.constant 0 : index
    %66 = vector.load %arg7[%c0_26, %c0_27, %c0_28] : memref<1x1x16xf32, #tpu.memory_space<vmem>>, vector<1x1x16xf32>
    %67 = vector.broadcast %66 : vector<1x1x16xf32> to vector<2x16x16xf32>
    %68 = arith.mulf %65, %67 : vector<2x16x16xf32>
    %69 = arith.truncf %68 : vector<2x16x16xf32> to vector<2x16x16xbf16>
    %c0_29 = arith.constant 0 : index
    %c0_30 = arith.constant 0 : index
    %c0_31 = arith.constant 0 : index
    %c0_32 = arith.constant 0 : index
    %70 = vector.load %arg9[%c0_29, %c0_30, %c0_31, %c0_32] : memref<1x2x16x16xbf16, #tpu.memory_space<vmem>>, vector<1x2x16x16xbf16>
    %71 = vector.shape_cast %70 : vector<1x2x16x16xbf16> to vector<2x16x16xbf16>
    %72 = vector.shape_cast %69 : vector<2x16x16xbf16> to vector<1x2x16x16xbf16>
    tpu.vector_store %arg9[%c0_29, %c0_30, %c0_31, %c0_32], %72 {strides = array<i32>} : memref<1x2x16x16xbf16, #tpu.memory_space<vmem>>, vector<1x2x16x16xbf16>,
    %73 = vector.extract_strided_slice %28 {offsets = [0, 64], sizes = [16, 16], strides = [1, 1]} : vector<16x96xf32> to vector<16x16xf32>
    %74 = vector.extract_strided_slice %28 {offsets = [0, 80], sizes = [16, 16], strides = [1, 1]} : vector<16x96xf32> to vector<16x16xf32>
    %75 = vector.shape_cast %73 : vector<16x16xf32> to vector<1x16x16xf32>
    %76 = vector.shape_cast %74 : vector<16x16xf32> to vector<1x16x16xf32>
    %77 = tpu.concatenate %75, %76 in 0 : vector<1x16x16xf32>, vector<1x16x16xf32> -> vector<2x16x16xf32>
    %78 = arith.truncf %77 : vector<2x16x16xf32> to vector<2x16x16xbf16>
    %c0_33 = arith.constant 0 : index
    %c0_34 = arith.constant 0 : index
    %c0_35 = arith.constant 0 : index
    %c0_36 = arith.constant 0 : index
    %79 = vector.load %arg10[%c0_33, %c0_34, %c0_35, %c0_36] : memref<1x2x16x16xbf16, #tpu.memory_space<vmem>>, vector<1x2x16x16xbf16>
    %80 = vector.shape_cast %79 : vector<1x2x16x16xbf16> to vector<2x16x16xbf16>
    %81 = vector.shape_cast %78 : vector<2x16x16xbf16> to vector<1x2x16x16xbf16>
    tpu.vector_store %arg10[%c0_33, %c0_34, %c0_35, %c0_36], %81 {strides = array<i32>} : memref<1x2x16x16xbf16, #tpu.memory_space<vmem>>, vector<1x2x16x16xbf16>,
    return
  }
  func.func @transform_0(%arg0: i32, %arg1: i32) -> (i32, i32, i32) {
    %c0_i32 = arith.constant 0 : i32
    %c0_i32_0 = arith.constant 0 : i32
    return %arg0, %arg1, %c0_i32 : i32, i32, i32
  }
  func.func @transform_1(%arg0: i32, %arg1: i32) -> (i32, i32) {
    %c0_i32 = arith.constant 0 : i32
    %c0_i32_0 = arith.constant 0 : i32
    %c0_i32_1 = arith.constant 0 : i32
    return %c0_i32, %c0_i32_0 : i32, i32
  }
  func.func @transform_2(%arg0: i32, %arg1: i32) -> (i32, i32) {
    %c0_i32 = arith.constant 0 : i32
    %c0_i32_0 = arith.constant 0 : i32
    %c0_i32_1 = arith.constant 0 : i32
    return %c0_i32, %c0_i32_0 : i32, i32
  }
  func.func @transform_3(%arg0: i32, %arg1: i32) -> (i32, i32) {
    %c0_i32 = arith.constant 0 : i32
    %c0_i32_0 = arith.constant 0 : i32
    %c0_i32_1 = arith.constant 0 : i32
    return %c0_i32, %c0_i32_0 : i32, i32
  }
  func.func @transform_4(%arg0: i32, %arg1: i32) -> (i32, i32, i32) {
    %c0_i32 = arith.constant 0 : i32
    %c0_i32_0 = arith.constant 0 : i32
    %c0_i32_1 = arith.constant 0 : i32
    %c0_i32_2 = arith.constant 0 : i32
    return %c0_i32, %c0_i32_0, %c0_i32_1 : i32, i32, i32
  }
  func.func @transform_5(%arg0: i32, %arg1: i32) -> (i32, i32, i32) {
    %c0_i32 = arith.constant 0 : i32
    %c0_i32_0 = arith.constant 0 : i32
    %c0_i32_1 = arith.constant 0 : i32
    %c0_i32_2 = arith.constant 0 : i32
    return %c0_i32, %c0_i32_0, %c0_i32_1 : i32, i32, i32
  }
  func.func @transform_6(%arg0: i32, %arg1: i32) -> (i32, i32, i32, i32) {
    %c0_i32 = arith.constant 0 : i32
    %c0_i32_0 = arith.constant 0 : i32
    %c0_i32_1 = arith.constant 0 : i32
    return %arg0, %c0_i32, %arg1, %c0_i32_0 : i32, i32, i32, i32
  }
  func.func @transform_7(%arg0: i32, %arg1: i32) -> (i32, i32, i32, i32) {
    %c0_i32 = arith.constant 0 : i32
    %c0_i32_0 = arith.constant 0 : i32
    %c0_i32_1 = arith.constant 0 : i32
    return %arg0, %c0_i32, %arg1, %c0_i32_0 : i32, i32, i32, i32
  }
  func.func @transform_8(%arg0: i32, %arg1: i32) -> (i32, i32, i32, i32) {
    %c0_i32 = arith.constant 0 : i32
    %c0_i32_0 = arith.constant 0 : i32
    %c0_i32_1 = arith.constant 0 : i32
    return %arg0, %c0_i32, %arg1, %c0_i32_0 : i32, i32, i32, i32
  }
}

</mosaic_0001>

<llo_original>
// kernel: tpu_custom_call.1
$region0: #{tpu_custom_call.1}
  #allocation0 [shape = 'u32[]', space=smem, size = 0x4, offset = 0x4, fixed_abs, tag = 'smem constant byte address 0x4 - core index']
  #allocation1 [shape = 'u32[72,128]{1,0:T(1,128)}', space=vmem, size = 0x9000, scoped, tag = 'internal scratch']
  %s0 = inlined_call_operand.hbm [shape: f32[2,32,32], index: 0, kind: input, shape index: {}]
  %s1 = inlined_call_operand.hbm [shape: bf16[32,96], index: 1, kind: input, shape index: {}]
  %s2 = inlined_call_operand.vmem [shape: f32[1,32], index: 2, kind: input, shape index: {}]
  %s3 = inlined_call_operand.vmem [shape: f32[1,32], index: 3, kind: input, shape index: {}]
  %s4 = inlined_call_operand.vmem [shape: f32[1,1,16], index: 4, kind: input, shape index: {}]
  %s5 = inlined_call_operand.vmem [shape: f32[1,1,16], index: 5, kind: input, shape index: {}]
  %s6 = inlined_call_operand.vmem [shape: bf16[2,2,32,16], index: 6, kind: output, shape index: {0}]
  %s7 = inlined_call_operand.vmem [shape: bf16[2,2,32,16], index: 7, kind: output, shape index: {1}]
  %s8 = inlined_call_operand.vmem [shape: bf16[2,2,32,16], index: 8, kind: output, shape index: {2}]
  %9 = xla_tuple %s6, %s7, %s8
  %s10 = sld [smem:[#allocation0]]
  $region192: #{tpu_custom_call.1} parent=0
    _
  %s12 = ssub.s32 1, %s10
  %s13 = scalar_select 0, %s12, %s10
  $region1: #{tpu_custom_call.1} parent=0
    #allocation2 [shape = 'u8[16384]{0}', space=vmem, size = 0x4000, scoped, tag = 'input window, operand 0']
    #allocation3 [shape = 's32[2]{0}', space=sflag, size = 0x8, scoped, tag = 'scoped memory for tpu_custom_call.1']
    #allocation4 [shape = 'u8[8192]{0}', space=vmem, size = 0x2000, scoped, tag = 'input window, operand 1, single buffered']
    #allocation5 [shape = 's32[1]{0}', space=sflag, size = 0x4, scoped, tag = 'scoped memory for tpu_custom_call.1']
    #allocation6 [shape = 'u8[16384]{0}', space=vmem, size = 0x4000, scoped, tag = 'output window, operand 0']
    #allocation7 [shape = 'u8[16384]{0}', space=vmem, size = 0x4000, scoped, tag = 'output window, operand 1']
    #allocation8 [shape = 'u8[16384]{0}', space=vmem, size = 0x4000, scoped, tag = 'output window, operand 2']
    %14 = vsyncpa [#allocation3], 0
    %s15 = scalar_lea.sflag [#allocation3], 1
    %16 = vsyncpa %s15, 0
    %17 = vsyncpa [#allocation5], 0
    loop: start=0, step=1, limit=6
    $region2: #{tpu_custom_call.1} parent=1 // loop_pre_header
      _
    $region3: #{tpu_custom_call.1} parent=1 // loop_header
      %s19 = sphi 0, %s23
      %p20 = scmp.ge.s32.totalorder %s19, 6
      %s26 = sphi 0, %s38
      %s27 = sphi 0, %s34
      %s28 = sphi 0, %s26
      %s29 = sphi 0, %s27
      %s30 = sphi 0, %s28
      %s31 = sphi 0, %s29
      %s43 = sphi 0, %s45
      %s46 = sphi 0, %s43
      %s47 = sphi 0, %s46
      %s63 = sphi 0, %s47
      %s67 = sphi 0, %s67
      %s69 = sphi 0, %s67
      %s70 = sphi 0, %s69
      %s84 = sphi 0, %s70
      %s88 = sphi 0, %s88
      %s90 = sphi 0, %s88
      %s91 = sphi 0, %s90
      %s105 = sphi 0, %s91
      %s109 = sphi 0, %s109
      %s111 = sphi 0, %s109
      %s112 = sphi 0, %s111
      %s126 = sphi 0, %s112
      %s130 = sphi 0, %s130
      %s132 = sphi 0, %s130
      %s133 = sphi 0, %s132
      %s147 = sphi 0, %s133
      %s151 = sphi 0, %s151
      %s153 = sphi 0, %s151
      %s154 = sphi 0, %s153
      %s168 = sphi 0, %s154
      %s176 = sphi 0, %s178
      %s179 = sphi 0, %s176
      %s180 = sphi 0, %s179
      %s196 = sphi 0, %s180
      %s204 = sphi 0, %s206
      %s207 = sphi 0, %s204
      %s208 = sphi 0, %s207
      %s224 = sphi 0, %s208
      %s232 = sphi 0, %s234
      %s235 = sphi 0, %s232
      %s236 = sphi 0, %s235
      %s252 = sphi 0, %s236
    $region4: #{tpu_custom_call.1} parent=1 // loop_header_branch
      %22 = sbr.rel (%p20) target = $region8
    $region5: #{tpu_custom_call.1} parent=1 // loop_body
      %s24 = ssub.s32 %s19, 1
      %s25 = ssub.s32 %s19, 2
      %s32 = sadd.s32 1, %s27
      %p33 = scmp.ge.s32.totalorder %s32, 2
      %s34 = scalar_select %p33, 0, %s32
      %s35 = sadd.s32 1, %s26
      %s36 = scalar_select %p33, %s35, %s26
      %p37 = scmp.ge.s32.totalorder %s36, 2
      %s38 = scalar_select %p37, 0, %s36
      %s39 = ssub.s32 %s26, %s38
      %s40 = ssub.s32 %s27, %s34
      %s41 = sor.u32 %s39, %s40
      %p42 = scmp.eq.s32.totalorder %s41, 0
      %s44 = sadd.s32 %s43, 1
      %s45 = scalar_select %p42, %s43, %s44
      %p48 = pneg %p42
      %p49 = scmp.eq.s32.totalorder %s19, 3
      %p50 = por %p48, %p49
      %p51 = scmp.ne.s32.totalorder %s43, %s46
      %p52 = scmp.eq.s32.totalorder %s19, 0
      %p53 = por %p51, %p52
      %p54 = scmp.ne.s32.totalorder %s43, %s46
      %p55 = scmp.eq.s32.totalorder %s24, 3
      %p56 = por %p54, %p55
      %p57 = scmp.ne.s32.totalorder %s46, %s47
      %p58 = scmp.eq.s32.totalorder %s24, 0
      %p59 = por %p57, %p58
      %p60 = scmp.ne.s32.totalorder %s46, %s47
      %p61 = scmp.eq.s32.totalorder %s25, 3
      %p62 = por %p60, %p61
      %p64 = scmp.ne.s32.totalorder %s47, %s63
      %p65 = scmp.eq.s32.totalorder %s25, 0
      %p66 = por %p64, %p65
      %s68 = sadd.s32 %s67, 1
      %p71 = scmp.eq.s32.totalorder %s19, 3
      %p72 = scmp.ne.s32.totalorder %s67, %s69
      %p73 = scmp.eq.s32.totalorder %s19, 0
      %p74 = por %p72, %p73
      %p75 = scmp.ne.s32.totalorder %s67, %s69
      %p76 = scmp.eq.s32.totalorder %s24, 3
      %p77 = por %p75, %p76
      %p78 = scmp.ne.s32.totalorder %s69, %s70
      %p79 = scmp.eq.s32.totalorder %s24, 0
      %p80 = por %p78, %p79
      %p81 = scmp.ne.s32.totalorder %s69, %s70
      %p82 = scmp.eq.s32.totalorder %s25, 3
      %p83 = por %p81, %p82
      %p85 = scmp.ne.s32.totalorder %s70, %s84
      %p86 = scmp.eq.s32.totalorder %s25, 0
      %p87 = por %p85, %p86
      %s89 = sadd.s32 %s88, 1
      %p92 = scmp.eq.s32.totalorder %s19, 3
      %p93 = scmp.ne.s32.totalorder %s88, %s90
      %p94 = scmp.eq.s32.totalorder %s19, 0
      %p95 = por %p93, %p94
      %p96 = scmp.ne.s32.totalorder %s88, %s90
      %p97 = scmp.eq.s32.totalorder %s24, 3
      %p98 = por %p96, %p97
      %p99 = scmp.ne.s32.totalorder %s90, %s91
      %p100 = scmp.eq.s32.totalorder %s24, 0
      %p101 = por %p99, %p100
      %p102 = scmp.ne.s32.totalorder %s90, %s91
      %p103 = scmp.eq.s32.totalorder %s25, 3
      %p104 = por %p102, %p103
      %p106 = scmp.ne.s32.totalorder %s91, %s105
      %p107 = scmp.eq.s32.totalorder %s25, 0
      %p108 = por %p106, %p107
      %s110 = sadd.s32 %s109, 1
      %p113 = scmp.eq.s32.totalorder %s19, 3
      %p114 = scmp.ne.s32.totalorder %s109, %s111
      %p115 = scmp.eq.s32.totalorder %s19, 0
      %p116 = por %p114, %p115
      %p117 = scmp.ne.s32.totalorder %s109, %s111
      %p118 = scmp.eq.s32.totalorder %s24, 3
      %p119 = por %p117, %p118
      %p120 = scmp.ne.s32.totalorder %s111, %s112
      %p121 = scmp.eq.s32.totalorder %s24, 0
      %p122 = por %p120, %p121
      %p123 = scmp.ne.s32.totalorder %s111, %s112
      %p124 = scmp.eq.s32.totalorder %s25, 3
      %p125 = por %p123, %p124
      %p127 = scmp.ne.s32.totalorder %s112, %s126
      %p128 = scmp.eq.s32.totalorder %s25, 0
      %p129 = por %p127, %p128
      %s131 = sadd.s32 %s130, 1
      %p134 = scmp.eq.s32.totalorder %s19, 3
      %p135 = scmp.ne.s32.totalorder %s130, %s132
      %p136 = scmp.eq.s32.totalorder %s19, 0
      %p137 = por %p135, %p136
      %p138 = scmp.ne.s32.totalorder %s130, %s132
      %p139 = scmp.eq.s32.totalorder %s24, 3
      %p140 = por %p138, %p139
      %p141 = scmp.ne.s32.totalorder %s132, %s133
      %p142 = scmp.eq.s32.totalorder %s24, 0
      %p143 = por %p141, %p142
      %p144 = scmp.ne.s32.totalorder %s132, %s133
      %p145 = scmp.eq.s32.totalorder %s25, 3
      %p146 = por %p144, %p145
      %p148 = scmp.ne.s32.totalorder %s133, %s147
      %p149 = scmp.eq.s32.totalorder %s25, 0
      %p150 = por %p148, %p149
      %s152 = sadd.s32 %s151, 1
      %p155 = scmp.eq.s32.totalorder %s19, 3
      %p156 = scmp.ne.s32.totalorder %s151, %s153
      %p157 = scmp.eq.s32.totalorder %s19, 0
      %p158 = por %p156, %p157
      %p159 = scmp.ne.s32.totalorder %s151, %s153
      %p160 = scmp.eq.s32.totalorder %s24, 3
      %p161 = por %p159, %p160
      %p162 = scmp.ne.s32.totalorder %s153, %s154
      %p163 = scmp.eq.s32.totalorder %s24, 0
      %p164 = por %p162, %p163
      %p165 = scmp.ne.s32.totalorder %s153, %s154
      %p166 = scmp.eq.s32.totalorder %s25, 3
      %p167 = por %p165, %p166
      %p169 = scmp.ne.s32.totalorder %s154, %s168
      %p170 = scmp.eq.s32.totalorder %s25, 0
      %p171 = por %p169, %p170
      %s172 = ssub.s32 %s26, %s38
      %s173 = ssub.s32 %s27, %s34
      %s174 = sor.u32 %s172, %s173
      %p175 = scmp.eq.s32.totalorder %s174, 0
      %s177 = sadd.s32 %s176, 1
      %s178 = scalar_select %p175, %s176, %s177
      %p181 = pneg %p175
      %p182 = scmp.eq.s32.totalorder %s19, 3
      %p183 = por %p181, %p182
      %p184 = scmp.ne.s32.totalorder %s176, %s179
      %p185 = scmp.eq.s32.totalorder %s19, 0
      %p186 = por %p184, %p185
      %p187 = scmp.ne.s32.totalorder %s176, %s179
      %p188 = scmp.eq.s32.totalorder %s24, 3
      %p189 = por %p187, %p188
      %p190 = scmp.ne.s32.totalorder %s179, %s180
      %p191 = scmp.eq.s32.totalorder %s24, 0
      %p192 = por %p190, %p191
      %p193 = scmp.ne.s32.totalorder %s179, %s180
      %p194 = scmp.eq.s32.totalorder %s25, 3
      %p195 = por %p193, %p194
      %p197 = scmp.ne.s32.totalorder %s180, %s196
      %p198 = scmp.eq.s32.totalorder %s25, 0
      %p199 = por %p197, %p198
      %s200 = ssub.s32 %s26, %s38
      %s201 = ssub.s32 %s27, %s34
      %s202 = sor.u32 %s200, %s201
      %p203 = scmp.eq.s32.totalorder %s202, 0
      %s205 = sadd.s32 %s204, 1
      %s206 = scalar_select %p203, %s204, %s205
      %p209 = pneg %p203
      %p210 = scmp.eq.s32.totalorder %s19, 3
      %p211 = por %p209, %p210
      %p212 = scmp.ne.s32.totalorder %s204, %s207
      %p213 = scmp.eq.s32.totalorder %s19, 0
      %p214 = por %p212, %p213
      %p215 = scmp.ne.s32.totalorder %s204, %s207
      %p216 = scmp.eq.s32.totalorder %s24, 3
      %p217 = por %p215, %p216
      %p218 = scmp.ne.s32.totalorder %s207, %s208
      %p219 = scmp.eq.s32.totalorder %s24, 0
      %p220 = por %p218, %p219
      %p221 = scmp.ne.s32.totalorder %s207, %s208
      %p222 = scmp.eq.s32.totalorder %s25, 3
      %p223 = por %p221, %p222
      %p225 = scmp.ne.s32.totalorder %s208, %s224
      %p226 = scmp.eq.s32.totalorder %s25, 0
      %p227 = por %p225, %p226
      %s228 = ssub.s32 %s26, %s38
      %s229 = ssub.s32 %s27, %s34
      %s230 = sor.u32 %s228, %s229
      %p231 = scmp.eq.s32.totalorder %s230, 0
      %s233 = sadd.s32 %s232, 1
      %s234 = scalar_select %p231, %s232, %s233
      %p237 = pneg %p231
      %p238 = scmp.eq.s32.totalorder %s19, 3
      %p239 = por %p237, %p238
      %p240 = scmp.ne.s32.totalorder %s232, %s235
      %p241 = scmp.eq.s32.totalorder %s19, 0
      %p242 = por %p240, %p241
      %p243 = scmp.ne.s32.totalorder %s232, %s235
      %p244 = scmp.eq.s32.totalorder %s24, 3
      %p245 = por %p243, %p244
      %p246 = scmp.ne.s32.totalorder %s235, %s236
      %p247 = scmp.eq.s32.totalorder %s24, 0
      %p248 = por %p246, %p247
      %p249 = scmp.ne.s32.totalorder %s235, %s236
      %p250 = scmp.eq.s32.totalorder %s25, 3
      %p251 = por %p249, %p250
      %p253 = scmp.ne.s32.totalorder %s236, %s252
      %p254 = scmp.eq.s32.totalorder %s25, 0
      %p255 = por %p253, %p254
      %p256 = scmp.le.s32.totalorder 1, %s19
      %p257 = scmp.lt.s32.totalorder %s19, 5
      %p258 = pnand %p256, %p257
      %p259 = pneg %p258
      // Predicated region
      $region9: #{tpu_custom_call.1} parent=5 // pred_check
        _
      $region10: #{tpu_custom_call.1} parent=5 // pred_check_branch
        %261 = sbr.rel (%p258) target = $region12
      $region11: #{tpu_custom_call.1} parent=5 // pred_region
        %s262 = ssub.s32 %s19, 1
        // Predicated region
        $region13: #{tpu_custom_call.1} parent=11 // pred_check
          %p263 = pneg %p80
        $region14: #{tpu_custom_call.1} parent=11 // pred_check_branch
          %265 = sbr.rel (%p263) target = $region16
        $region15: #{tpu_custom_call.1} parent=11 // pred_region
          %267 = vsyncadd [#allocation5], 0
          %s268 = sshll.u32 %s1, 4
          %s269 = int_to_ptr.hbm [resolvable:$true] %s268
          %s270 = sshll.u32 [#allocation4], 4
          %s271 = int_to_ptr.vmem [resolvable:$true] %s270
          %276 = dma.hbm_to_vmem [thread:$0]  %s269, 256, %s271, [#allocation5], 64, 64, 4
        $region16: #{tpu_custom_call.1} parent=11 // pred_fallthru
          _
        // Predicated region
        $region17: #{tpu_custom_call.1} parent=11 // pred_check
          %p277 = pneg %p101
        $region18: #{tpu_custom_call.1} parent=11 // pred_check_branch
          %279 = sbr.rel (%p277) target = $region20
        $region19: #{tpu_custom_call.1} parent=11 // pred_region
          _
        $region20: #{tpu_custom_call.1} parent=11 // pred_fallthru
          _
        // Predicated region
        $region21: #{tpu_custom_call.1} parent=11 // pred_check
          %p280 = pneg %p122
        $region22: #{tpu_custom_call.1} parent=11 // pred_check_branch
          %282 = sbr.rel (%p280) target = $region24
        $region23: #{tpu_custom_call.1} parent=11 // pred_region
          _
        $region24: #{tpu_custom_call.1} parent=11 // pred_fallthru
          _
        // Predicated region
        $region25: #{tpu_custom_call.1} parent=11 // pred_check
          %p283 = pneg %p143
        $region26: #{tpu_custom_call.1} parent=11 // pred_check_branch
          %285 = sbr.rel (%p283) target = $region28
        $region27: #{tpu_custom_call.1} parent=11 // pred_region
          _
        $region28: #{tpu_custom_call.1} parent=11 // pred_fallthru
          _
        // Predicated region
        $region29: #{tpu_custom_call.1} parent=11 // pred_check
          %p286 = pneg %p164
        $region30: #{tpu_custom_call.1} parent=11 // pred_check_branch
          %288 = sbr.rel (%p286) target = $region32
        $region31: #{tpu_custom_call.1} parent=11 // pred_region
          _
        $region32: #{tpu_custom_call.1} parent=11 // pred_fallthru
          _
      $region12: #{tpu_custom_call.1} parent=5 // pred_fallthru
        _
      %p289 = scmp.lt.s32.totalorder %s19, 4
      // Predicated region
      $region33: #{tpu_custom_call.1} parent=5 // pred_check
        %p290 = pneg %p289
      $region34: #{tpu_custom_call.1} parent=5 // pred_check_branch
        %292 = sbr.rel (%p290) target = $region36
      $region35: #{tpu_custom_call.1} parent=5 // pred_region
        // Predicated region
        $region37: #{tpu_custom_call.1} parent=35 // pred_check
          %p293 = pneg %p53
        $region38: #{tpu_custom_call.1} parent=35 // pred_check_branch
          %295 = sbr.rel (%p293) target = $region40
        $region39: #{tpu_custom_call.1} parent=35 // pred_region
          %s296 = sand.u32 %s43, 1
          %s297 = scalar_lea.sflag [#allocation3], %s296
          %s298 = sand.u32 %s43, 1
          %s299 = smul.addr %s298, 16
          %s300 = scalar_lea.vmem [#allocation2], %s299
          %s301 = smul.u32 2, %s27
          %303 = vsyncadd %s297, 0
          %s304 = smul.addr %s26, 4
          %s305 = sadd.s32 %s301, %s304
          %s306 = smul.addr %s305, 8
          %s307 = scalar_lea.hbm %s0, %s306
          %s308 = sshll.u32 %s307, 4
          %s309 = int_to_ptr.hbm [resolvable:$true] %s308
          %s310 = sshll.u32 %s300, 4
          %s311 = int_to_ptr.vmem [resolvable:$true] %s310
          %316 = dma.hbm_to_vmem [thread:$0]  %s309, 256, %s311, %s297, 128, 128, 8
        $region40: #{tpu_custom_call.1} parent=35 // pred_fallthru
          _
      $region36: #{tpu_custom_call.1} parent=5 // pred_fallthru
        _
      %p317 = scmp.le.s32.totalorder 1, %s19
      %p318 = scmp.lt.s32.totalorder %s19, 5
      %p319 = pnand %p317, %p318
      %p320 = pneg %p319
      // Predicated region
      $region41: #{tpu_custom_call.1} parent=5 // pred_check
        _
      $region42: #{tpu_custom_call.1} parent=5 // pred_check_branch
        %322 = sbr.rel (%p319) target = $region44
      $region43: #{tpu_custom_call.1} parent=5 // pred_region
        %s323 = ssub.s32 %s19, 1
        %s324 = sand.u32 %s46, 1
        %s325 = scalar_lea.sflag [#allocation3], %s324
        %s326 = sand.u32 %s46, 1
        %s327 = smul.addr %s326, 16
        %s328 = scalar_lea.vmem [#allocation2], %s327
        // Predicated region
        $region45: #{tpu_custom_call.1} parent=43 // pred_check
          %p329 = pneg %p59
        $region46: #{tpu_custom_call.1} parent=43 // pred_check_branch
          %331 = sbr.rel (%p329) target = $region48
        $region47: #{tpu_custom_call.1} parent=43 // pred_region
          %333 = dma.done %s325, 256
        $region48: #{tpu_custom_call.1} parent=43 // pred_fallthru
          _
        // Predicated region
        $region49: #{tpu_custom_call.1} parent=43 // pred_check
          %p334 = pneg %p80
        $region50: #{tpu_custom_call.1} parent=43 // pred_check_branch
          %336 = sbr.rel (%p334) target = $region52
        $region51: #{tpu_custom_call.1} parent=43 // pred_region
          %338 = dma.done [#allocation5], 256
        $region52: #{tpu_custom_call.1} parent=43 // pred_fallthru
          _
        %s339 = sand.u32 %s46, 1
        %s340 = scalar_lea.sflag [#allocation3], %s339
        %s341 = sand.u32 %s46, 1
        %s342 = smul.addr %s341, 16
        %s343 = scalar_lea.vmem [#allocation2], %s342
        %p344 = pneg %p59
        %p345 = pneg %p56
        %p346 = pneg %p80
        %p347 = pneg %p77
        %p348 = pneg %p101
        %p349 = pneg %p98
        %p350 = pneg %p122
        %p351 = pneg %p119
        %p352 = pneg %p143
        %p353 = pneg %p140
        %p354 = pneg %p164
        %p355 = pneg %p161
        %p356 = pneg %p192
        %p357 = pneg %p189
        %s358 = sand.u32 %s179, 1
        %s359 = sand.u32 %s179, 1
        %s360 = smul.addr %s359, 16
        %s361 = scalar_lea.vmem [#allocation6], %s360
        %p362 = pneg %p220
        %p363 = pneg %p217
        %s364 = sand.u32 %s207, 1
        %s365 = sand.u32 %s207, 1
        %s366 = smul.addr %s365, 16
        %s367 = scalar_lea.vmem [#allocation7], %s366
        %p368 = pneg %p248
        %p369 = pneg %p245
        %s370 = sand.u32 %s235, 1
        %s371 = sand.u32 %s235, 1
        %s372 = smul.addr %s371, 16
        %s373 = scalar_lea.vmem [#allocation8], %s372
        %s374 = smul.u32 2, %s29
        %s375 = smul.u32 2, %s29
        %s376 = smul.u32 2, %s29
        %s377 = smul.u32 2, %s29
        %v379 = vld [vmem:[%s328] sm:$0xff]
        %v380 = vld [vmem:[%s328 + $0x8] sm:$0xff]
        %vm381 = vcmask 261120
        %v382 = vsel %vm381, %v379, 0.0
        %383 = vadd.xlane.f32.xlu0 %v382
        %v384 = vpop.xlane.xlu0 %383
        %v385 = vsel %vm381, %v380, 0.0
        %386 = vadd.xlane.f32.xlu0 %v385
        %v387 = vpop.xlane.xlu0 %386
        %v388 = vrcp.pop 32.0
        %v389 = vmul.f32 32.0, %v388
        %v390 = vsub.f32 1.0, %v389
        %v391 = vmul.f32 %v388, %v390
        %v392 = vadd.f32 %v388, %v391
        %vm393 = vweird.f32 %v388
        %v394 = vsel %vm393, %v388, %v392
        %v395 = vmul.f32 %v384, %v394
        %v396 = vmul.f32 %v387, %v394
        %v397 = vsub.f32 %v379, %v395
        %v398 = vsub.f32 %v380, %v396
        %v399 = vmul.f32 %v397, %v397
        %v400 = vmul.f32 %v398, %v398
        %v401 = vsel %vm381, %v399, 0.0
        %402 = vadd.xlane.f32.xlu0 %v401
        %v403 = vpop.xlane.xlu0 %402
        %v404 = vsel %vm381, %v400, 0.0
        %405 = vadd.xlane.f32.xlu0 %v404
        %v406 = vpop.xlane.xlu0 %405
        %v407 = vmul.f32 %v403, %v394
        %v408 = vmul.f32 %v406, %v394
        %v409 = vadd.f32 %v407, 1e-05
        %v410 = vadd.f32 %v408, 1e-05
        %v411 = vrsqrt.pop %v409
        %v412 = vmul.f32 %v411, %v409
        %v413 = vmul.f32 %v412, %v411
        %v414 = vmul.f32 0.5, %v413
        %v415 = vsub.f32 1.5, %v414
        %v416 = vmul.f32 %v411, %v415
        %vm417 = vweird.f32 %v409
        %vm418 = vweird.f32 %v411
        %vm419 = vmor %vm417, %vm418
        %v420 = vsel %vm419, %v411, %v416
        %v421 = vrsqrt.pop %v410
        %v422 = vmul.f32 %v421, %v410
        %v423 = vmul.f32 %v422, %v421
        %v424 = vmul.f32 0.5, %v423
        %v425 = vsub.f32 1.5, %v424
        %v426 = vmul.f32 %v421, %v425
        %vm427 = vweird.f32 %v410
        %vm428 = vweird.f32 %v421
        %vm429 = vmor %vm427, %vm428
        %v430 = vsel %vm429, %v421, %v426
        %v431 = vmul.f32 %v397, %v420
        %v432 = vmul.f32 %v398, %v430
        %v433 = vld [vmem:[%s2] sm:$0x1]
        %v435 = vperm.slane %v433, 0
        %v437 = vmul.f32 %v431, %v435
        %v438 = vmul.f32 %v432, %v435
        %v439 = vld [vmem:[%s3] sm:$0x1]
        %v441 = vperm.slane %v439, 0
        %v443 = vadd.f32 %v437, %v441
        %v444 = vadd.f32 %v438, %v441
        %v445 = vpack.c.bf16 %v444, %v443
        %v446 = vld [vmem:[#allocation4] sm:$0xf]
        %v447 = vld [vmem:[#allocation4 + $0x4] sm:$0xf]
        %v448 = vld [vmem:[#allocation4 + $0x8] sm:$0xf]
        %v449 = vld [vmem:[#allocation4 + $0xc] sm:$0xf]
        %v454 = vunpack.c.l.b16 %v446
        %v455 = vunpack.c.l.b16 %v447
        %v456 = vunpack.c.l.b16 %v448
        %v457 = vunpack.c.l.b16 %v449
        %v458 = vpack.c.b16 %v455, %v454
        %v459 = vpack.c.b16 %v457, %v456
        %v463 = vsel %vm381, %v445, 0
        %465 = vmatpush.bf16.msra.mxu0 0
        %466 = vmatpush.bf16.msra.mxu0 0
        %467 = vmatpush.bf16.msra.mxu0 0
        %468 = vmatpush.bf16.msra.mxu0 0
        %469 = vmatpush.bf16.msra.mxu0 0
        %470 = vmatpush.bf16.msra.mxu0 0
        %471 = vmatpush.bf16.msra.mxu0 %v459
        %472 = vmatpush.bf16.msra.mxu0 %v458
        %473 = vmatmul.bf16.gmra.mxu0 %v463
        %v474 = vpop.f32.mrf.mxu0
        %v475 = vadd.f32 0.0, %v474
        %v476 = vpop.f32.mrf.mxu0
        %v477 = vadd.f32 0.0, %v476
        %478 = vdwg.mxu0
        %481 = vrot.lane.b32.xlu0 %v475, 112
        %v482 = vpop.permute.xlu0 %481
        %483 = vrot.lane.b32.xlu0 %v477, 112
        %v484 = vpop.permute.xlu0 %483
        %v487 = vmul.f32 %v475, %v475
        %v488 = vmul.f32 %v477, %v477
        %v489 = vmul.f32 %v482, %v482
        %v490 = vmul.f32 %v484, %v484
        %vm491 = vcmask 130048
        %v492 = vsel %vm491, %v487, 0.0
        %493 = vadd.xlane.f32.xlu0 %v492
        %v494 = vpop.xlane.xlu0 %493
        %v495 = vsel %vm491, %v488, 0.0
        %496 = vadd.xlane.f32.xlu0 %v495
        %v497 = vpop.xlane.xlu0 %496
        %v498 = vsel %vm491, %v489, 0.0
        %499 = vadd.xlane.f32.xlu0 %v498
        %v500 = vpop.xlane.xlu0 %499
        %v501 = vsel %vm491, %v490, 0.0
        %502 = vadd.xlane.f32.xlu0 %v501
        %v503 = vpop.xlane.xlu0 %502
        %v504 = vrsqrt.pop %v494
        %v505 = vmul.f32 %v504, %v494
        %v506 = vmul.f32 %v505, %v504
        %v507 = vmul.f32 0.5, %v506
        %v508 = vsub.f32 1.5, %v507
        %v509 = vmul.f32 %v504, %v508
        %v510 = vmul.f32 %v494, %v509
        %vm511 = vcmp.eq.f32.partialorder %v494, inf
        %v512 = vsel %vm511, %v494, %v510
        %vm513 = vcmp.eq.f32.partialorder %v494, 0.0
        %v514 = vand.u32 %v494, 2147483648
        %v515 = vsel %vm513, %v514, %v512
        %v516 = vrsqrt.pop %v497
        %v517 = vmul.f32 %v516, %v497
        %v518 = vmul.f32 %v517, %v516
        %v519 = vmul.f32 0.5, %v518
        %v520 = vsub.f32 1.5, %v519
        %v521 = vmul.f32 %v516, %v520
        %v522 = vmul.f32 %v497, %v521
        %vm523 = vcmp.eq.f32.partialorder %v497, inf
        %v524 = vsel %vm523, %v497, %v522
        %vm525 = vcmp.eq.f32.partialorder %v497, 0.0
        %v526 = vand.u32 %v497, 2147483648
        %v527 = vsel %vm525, %v526, %v524
        %v528 = vrsqrt.pop %v500
        %v529 = vmul.f32 %v528, %v500
        %v530 = vmul.f32 %v529, %v528
        %v531 = vmul.f32 0.5, %v530
        %v532 = vsub.f32 1.5, %v531
        %v533 = vmul.f32 %v528, %v532
        %v534 = vmul.f32 %v500, %v533
        %vm535 = vcmp.eq.f32.partialorder %v500, inf
        %v536 = vsel %vm535, %v500, %v534
        %vm537 = vcmp.eq.f32.partialorder %v500, 0.0
        %v538 = vand.u32 %v500, 2147483648
        %v539 = vsel %vm537, %v538, %v536
        %v540 = vrsqrt.pop %v503
        %v541 = vmul.f32 %v540, %v503
        %v542 = vmul.f32 %v541, %v540
        %v543 = vmul.f32 0.5, %v542
        %v544 = vsub.f32 1.5, %v543
        %v545 = vmul.f32 %v540, %v544
        %v546 = vmul.f32 %v503, %v545
        %vm547 = vcmp.eq.f32.partialorder %v503, inf
        %v548 = vsel %vm547, %v503, %v546
        %vm549 = vcmp.eq.f32.partialorder %v503, 0.0
        %v550 = vand.u32 %v503, 2147483648
        %v551 = vsel %vm549, %v550, %v548
        %v552 = vmax.f32 %v515, 1e-12
        %v553 = vmax.f32 %v527, 1e-12
        %v554 = vmax.f32 %v539, 1e-12
        %v555 = vmax.f32 %v551, 1e-12
        %v556 = vrcp.pop %v552
        %v557 = vmul.f32 %v552, %v556
        %v558 = vsub.f32 1.0, %v557
        %v559 = vmul.f32 %v556, %v558
        %v560 = vadd.f32 %v556, %v559
        %vm561 = vweird.f32 %v552
        %vm562 = vweird.f32 %v556
        %vm563 = vmor %vm561, %vm562
        %v564 = vsel %vm563, %v556, %v560
        %v565 = vand.u32 2147483647, %v552
        %vm566 = vcmp.eq.f32.partialorder %v565, 8.507059e+37
        %v567 = vand.u32 %v552, 2147483648
        %v568 = vor.u32 1.1754944e-38, %v567
        %v569 = vsel %vm566, %v568, %v564
        %v570 = vmul.f32 1.0, %v569
        %v571 = vrcp.pop %v553
        %v572 = vmul.f32 %v553, %v571
        %v573 = vsub.f32 1.0, %v572
        %v574 = vmul.f32 %v571, %v573
        %v575 = vadd.f32 %v571, %v574
        %vm576 = vweird.f32 %v553
        %vm577 = vweird.f32 %v571
        %vm578 = vmor %vm576, %vm577
        %v579 = vsel %vm578, %v571, %v575
        %v580 = vand.u32 2147483647, %v553
        %vm581 = vcmp.eq.f32.partialorder %v580, 8.507059e+37
        %v582 = vand.u32 %v553, 2147483648
        %v583 = vor.u32 1.1754944e-38, %v582
        %v584 = vsel %vm581, %v583, %v579
        %v585 = vmul.f32 1.0, %v584
        %v586 = vrcp.pop %v554
        %v587 = vmul.f32 %v554, %v586
        %v588 = vsub.f32 1.0, %v587
        %v589 = vmul.f32 %v586, %v588
        %v590 = vadd.f32 %v586, %v589
        %vm591 = vweird.f32 %v554
        %vm592 = vweird.f32 %v586
        %vm593 = vmor %vm591, %vm592
        %v594 = vsel %vm593, %v586, %v590
        %v595 = vand.u32 2147483647, %v554
        %vm596 = vcmp.eq.f32.partialorder %v595, 8.507059e+37
        %v597 = vand.u32 %v554, 2147483648
        %v598 = vor.u32 1.1754944e-38, %v597
        %v599 = vsel %vm596, %v598, %v594
        %v600 = vmul.f32 1.0, %v599
        %v601 = vrcp.pop %v555
        %v602 = vmul.f32 %v555, %v601
        %v603 = vsub.f32 1.0, %v602
        %v604 = vmul.f32 %v601, %v603
        %v605 = vadd.f32 %v601, %v604
        %vm606 = vweird.f32 %v555
        %vm607 = vweird.f32 %v601
        %vm608 = vmor %vm606, %vm607
        %v609 = vsel %vm608, %v601, %v605
        %v610 = vand.u32 2147483647, %v555
        %vm611 = vcmp.eq.f32.partialorder %v610, 8.507059e+37
        %v612 = vand.u32 %v555, 2147483648
        %v613 = vor.u32 1.1754944e-38, %v612
        %v614 = vsel %vm611, %v613, %v609
        %v615 = vmul.f32 1.0, %v614
        %v616 = vmul.f32 %v475, %v570
        %v617 = vmul.f32 %v477, %v585
        %v618 = vmul.f32 %v482, %v600
        %v619 = vmul.f32 %v484, %v615
        %v620 = vld [vmem:[%s4] sm:$0x1]
        %v622 = vperm.slane %v620, 0
        %v624 = vmul.f32 %v616, %v622
        %v625 = vmul.f32 %v617, %v622
        %v626 = vmul.f32 %v618, %v622
        %v627 = vmul.f32 %v619, %v622
        %v628 = vpack.c.bf16 %v624, %v624
        %v629 = vpack.c.bf16 %v625, %v625
        %v630 = vpack.c.bf16 %v626, %v626
        %v631 = vpack.c.bf16 %v627, %v627
        %vm632 = vcmask 125952
        %633 = vst.msk [vmem:[%s361] sm:$0xf] %vm632, %v628
        %634 = vst.msk [vmem:[%s361 + $0x4] sm:$0xf] %vm632, %v629
        %635 = vst.msk [vmem:[%s361 + $0x8] sm:$0xf] %vm632, %v630
        %636 = vst.msk [vmem:[%s361 + $0xc] sm:$0xf] %vm632, %v631
        %641 = vrot.lane.b32.xlu0 %v487, 96
        %v642 = vpop.permute.xlu0 %641
        %643 = vrot.lane.b32.xlu0 %v488, 96
        %v644 = vpop.permute.xlu0 %643
        %645 = vrot.lane.b32.xlu0 %v489, 96
        %v646 = vpop.permute.xlu0 %645
        %647 = vrot.lane.b32.xlu0 %v490, 96
        %v648 = vpop.permute.xlu0 %647
        %v653 = vsel %vm491, %v642, 0.0
        %654 = vadd.xlane.f32.xlu0 %v653
        %v655 = vpop.xlane.xlu0 %654
        %v656 = vsel %vm491, %v644, 0.0
        %657 = vadd.xlane.f32.xlu0 %v656
        %v658 = vpop.xlane.xlu0 %657
        %v659 = vsel %vm491, %v646, 0.0
        %660 = vadd.xlane.f32.xlu0 %v659
        %v661 = vpop.xlane.xlu0 %660
        %v662 = vsel %vm491, %v648, 0.0
        %663 = vadd.xlane.f32.xlu0 %v662
        %v664 = vpop.xlane.xlu0 %663
        %v665 = vrsqrt.pop %v655
        %v666 = vmul.f32 %v665, %v655
        %v667 = vmul.f32 %v666, %v665
        %v668 = vmul.f32 0.5, %v667
        %v669 = vsub.f32 1.5, %v668
        %v670 = vmul.f32 %v665, %v669
        %v671 = vmul.f32 %v655, %v670
        %vm672 = vcmp.eq.f32.partialorder %v655, inf
        %v673 = vsel %vm672, %v655, %v671
        %vm674 = vcmp.eq.f32.partialorder %v655, 0.0
        %v675 = vand.u32 %v655, 2147483648
        %v676 = vsel %vm674, %v675, %v673
        %v677 = vrsqrt.pop %v658
        %v678 = vmul.f32 %v677, %v658
        %v679 = vmul.f32 %v678, %v677
        %v680 = vmul.f32 0.5, %v679
        %v681 = vsub.f32 1.5, %v680
        %v682 = vmul.f32 %v677, %v681
        %v683 = vmul.f32 %v658, %v682
        %vm684 = vcmp.eq.f32.partialorder %v658, inf
        %v685 = vsel %vm684, %v658, %v683
        %vm686 = vcmp.eq.f32.partialorder %v658, 0.0
        %v687 = vand.u32 %v658, 2147483648
        %v688 = vsel %vm686, %v687, %v685
        %v689 = vrsqrt.pop %v661
        %v690 = vmul.f32 %v689, %v661
        %v691 = vmul.f32 %v690, %v689
        %v692 = vmul.f32 0.5, %v691
        %v693 = vsub.f32 1.5, %v692
        %v694 = vmul.f32 %v689, %v693
        %v695 = vmul.f32 %v661, %v694
        %vm696 = vcmp.eq.f32.partialorder %v661, inf
        %v697 = vsel %vm696, %v661, %v695
        %vm698 = vcmp.eq.f32.partialorder %v661, 0.0
        %v699 = vand.u32 %v661, 2147483648
        %v700 = vsel %vm698, %v699, %v697
        %v701 = vrsqrt.pop %v664
        %v702 = vmul.f32 %v701, %v664
        %v703 = vmul.f32 %v702, %v701
        %v704 = vmul.f32 0.5, %v703
        %v705 = vsub.f32 1.5, %v704
        %v706 = vmul.f32 %v701, %v705
        %v707 = vmul.f32 %v664, %v706
        %vm708 = vcmp.eq.f32.partialorder %v664, inf
        %v709 = vsel %vm708, %v664, %v707
        %vm710 = vcmp.eq.f32.partialorder %v664, 0.0
        %v711 = vand.u32 %v664, 2147483648
        %v712 = vsel %vm710, %v711, %v709
        %v713 = vmax.f32 %v676, 1e-12
        %v714 = vmax.f32 %v688, 1e-12
        %v715 = vmax.f32 %v700, 1e-12
        %v716 = vmax.f32 %v712, 1e-12
        %v717 = vrcp.pop %v713
        %v718 = vmul.f32 %v713, %v717
        %v719 = vsub.f32 1.0, %v718
        %v720 = vmul.f32 %v717, %v719
        %v721 = vadd.f32 %v717, %v720
        %vm722 = vweird.f32 %v713
        %vm723 = vweird.f32 %v717
        %vm724 = vmor %vm722, %vm723
        %v725 = vsel %vm724, %v717, %v721
        %v726 = vand.u32 2147483647, %v713
        %vm727 = vcmp.eq.f32.partialorder %v726, 8.507059e+37
        %v728 = vand.u32 %v713, 2147483648
        %v729 = vor.u32 1.1754944e-38, %v728
        %v730 = vsel %vm727, %v729, %v725
        %v731 = vmul.f32 1.0, %v730
        %v732 = vrcp.pop %v714
        %v733 = vmul.f32 %v714, %v732
        %v734 = vsub.f32 1.0, %v733
        %v735 = vmul.f32 %v732, %v734
        %v736 = vadd.f32 %v732, %v735
        %vm737 = vweird.f32 %v714
        %vm738 = vweird.f32 %v732
        %vm739 = vmor %vm737, %vm738
        %v740 = vsel %vm739, %v732, %v736
        %v741 = vand.u32 2147483647, %v714
        %vm742 = vcmp.eq.f32.partialorder %v741, 8.507059e+37
        %v743 = vand.u32 %v714, 2147483648
        %v744 = vor.u32 1.1754944e-38, %v743
        %v745 = vsel %vm742, %v744, %v740
        %v746 = vmul.f32 1.0, %v745
        %v747 = vrcp.pop %v715
        %v748 = vmul.f32 %v715, %v747
        %v749 = vsub.f32 1.0, %v748
        %v750 = vmul.f32 %v747, %v749
        %v751 = vadd.f32 %v747, %v750
        %vm752 = vweird.f32 %v715
        %vm753 = vweird.f32 %v747
        %vm754 = vmor %vm752, %vm753
        %v755 = vsel %vm754, %v747, %v751
        %v756 = vand.u32 2147483647, %v715
        %vm757 = vcmp.eq.f32.partialorder %v756, 8.507059e+37
        %v758 = vand.u32 %v715, 2147483648
        %v759 = vor.u32 1.1754944e-38, %v758
        %v760 = vsel %vm757, %v759, %v755
        %v761 = vmul.f32 1.0, %v760
        %v762 = vrcp.pop %v716
        %v763 = vmul.f32 %v716, %v762
        %v764 = vsub.f32 1.0, %v763
        %v765 = vmul.f32 %v762, %v764
        %v766 = vadd.f32 %v762, %v765
        %vm767 = vweird.f32 %v716
        %vm768 = vweird.f32 %v762
        %vm769 = vmor %vm767, %vm768
        %v770 = vsel %vm769, %v762, %v766
        %v771 = vand.u32 2147483647, %v716
        %vm772 = vcmp.eq.f32.partialorder %v771, 8.507059e+37
        %v773 = vand.u32 %v716, 2147483648
        %v774 = vor.u32 1.1754944e-38, %v773
        %v775 = vsel %vm772, %v774, %v770
        %v776 = vmul.f32 1.0, %v775
        %v777 = vmul.f32 %v475, %v731
        %v778 = vmul.f32 %v477, %v746
        %v779 = vmul.f32 %v482, %v761
        %v780 = vmul.f32 %v484, %v776
        %v781 = vld [vmem:[%s5] sm:$0x1]
        %v783 = vperm.slane %v781, 0
        %784 = vrot.lane.b32.xlu0 %v783, 32
        %v785 = vpop.permute.xlu0 %784
        %v787 = vmul.f32 %v777, %v785
        %v788 = vmul.f32 %v778, %v785
        %v789 = vmul.f32 %v779, %v785
        %v790 = vmul.f32 %v780, %v785
        %v791 = vpack.c.bf16 %v787, %v787
        %v792 = vpack.c.bf16 %v788, %v788
        %v793 = vpack.c.bf16 %v789, %v789
        %v794 = vpack.c.bf16 %v790, %v790
        %799 = vrot.lane.b32.xlu0 %v791, 96
        %v800 = vpop.permute.xlu0 %799
        %801 = vrot.lane.b32.xlu0 %v792, 96
        %v802 = vpop.permute.xlu0 %801
        %803 = vrot.lane.b32.xlu0 %v793, 96
        %v804 = vpop.permute.xlu0 %803
        %805 = vrot.lane.b32.xlu0 %v794, 96
        %v806 = vpop.permute.xlu0 %805
        %811 = vst.msk [vmem:[%s367] sm:$0xf] %vm632, %v800
        %812 = vst.msk [vmem:[%s367 + $0x4] sm:$0xf] %vm632, %v802
        %813 = vst.msk [vmem:[%s367 + $0x8] sm:$0xf] %vm632, %v804
        %814 = vst.msk [vmem:[%s367 + $0xc] sm:$0xf] %vm632, %v806
        %v815 = vpack.c.bf16 %v475, %v475
        %v816 = vpack.c.bf16 %v477, %v477
        %v817 = vpack.c.bf16 %v482, %v482
        %v818 = vpack.c.bf16 %v484, %v484
        %823 = vrot.lane.b32.xlu0 %v815, 64
        %v824 = vpop.permute.xlu0 %823
        %825 = vrot.lane.b32.xlu0 %v816, 64
        %v826 = vpop.permute.xlu0 %825
        %827 = vrot.lane.b32.xlu0 %v817, 64
        %v828 = vpop.permute.xlu0 %827
        %829 = vrot.lane.b32.xlu0 %v818, 64
        %v830 = vpop.permute.xlu0 %829
        %835 = vst.msk [vmem:[%s373] sm:$0xf] %vm632, %v824
        %836 = vst.msk [vmem:[%s373 + $0x4] sm:$0xf] %vm632, %v826
        %837 = vst.msk [vmem:[%s373 + $0x8] sm:$0xf] %vm632, %v828
        %838 = vst.msk [vmem:[%s373 + $0xc] sm:$0xf] %vm632, %v830
        %s839 = sand.u32 %s179, 1
        %s840 = sand.u32 %s179, 1
        %s841 = smul.addr %s840, 16
        %s842 = scalar_lea.vmem [#allocation6], %s841
        %s843 = sand.u32 %s207, 1
        %s844 = sand.u32 %s207, 1
        %s845 = smul.addr %s844, 16
        %s846 = scalar_lea.vmem [#allocation7], %s845
        %s847 = sand.u32 %s235, 1
        %s848 = sand.u32 %s235, 1
        %s849 = smul.addr %s848, 16
        %s850 = scalar_lea.vmem [#allocation8], %s849
        // Predicated region
        $region53: #{tpu_custom_call.1} parent=43 // pred_check
          %p851 = pneg %p189
        $region54: #{tpu_custom_call.1} parent=43 // pred_check_branch
          %853 = sbr.rel (%p851) target = $region56
        $region55: #{tpu_custom_call.1} parent=43 // pred_region
          %s854 = smul.u32 2, %s29
          %s855 = smul.addr %s28, 8
          %s856 = sadd.s32 %s854, %s855
          %s857 = smul.addr %s856, 4
          %s858 = scalar_lea.vmem %s6, %s857
          // Predicated region
          $region57: #{tpu_custom_call.1} parent=55 // pred_check
            _
          $region58: #{tpu_custom_call.1} parent=55 // pred_check_branch
            %860 = sbr.rel (0) target = $region60
          $region59: #{tpu_custom_call.1} parent=55 // pred_region
            // Predicated region
            $region61: #{tpu_custom_call.1} parent=59 // pred_check
              _
            $region62: #{tpu_custom_call.1} parent=59 // pred_check_branch
              %862 = sbr.rel target = $region64
            $region63: #{tpu_custom_call.1} parent=59 // pred_region
              // Predicated region
              $region76: #{tpu_custom_call.1} parent=63 // pred_check
                _
              $region77: #{tpu_custom_call.1} parent=63 // pred_check_branch
                %884 = sbr.rel (0) target = $region79
              $region78: #{tpu_custom_call.1} parent=63 // pred_region
                loop: start=0, step=1, limit=1
                $region80: #{tpu_custom_call.1} parent=78 // loop_pre_header
                  _
                $region81: #{tpu_custom_call.1} parent=78 // loop_header
                  %s886 = sphi 0, %s890
                  %p887 = scmp.ge.s32.totalorder %s886, 1
                  %s891 = sphi %s842, %s842
                  %s892 = sphi %s858, %s858
                $region82: #{tpu_custom_call.1} parent=78 // loop_header_branch
                  %889 = sbr.rel (%p887) target = $region86
                $region83: #{tpu_custom_call.1} parent=78 // loop_body
                  _
                $region84: #{tpu_custom_call.1} parent=78 // loop_footer
                  %s890 = sadd.s32 1, %s886
                $region85: #{tpu_custom_call.1} parent=78 // loop_footer_branch
                  %885 = sbr.rel target = $region81
                $region86: #{tpu_custom_call.1} parent=78 // loop_exit
                  _
                %s894 = ssub.s32 16, 1
                loop: start=0, step=1, limit=1
                $region87: #{tpu_custom_call.1} parent=78 // loop_pre_header
                  _
                $region88: #{tpu_custom_call.1} parent=78 // loop_header
                  %s896 = sphi 0, %s900
                  %p897 = scmp.ge.s32.totalorder %s896, 1
                  %s901 = sphi %s842, %s842
                  %s902 = sphi %s858, %s858
                $region89: #{tpu_custom_call.1} parent=78 // loop_header_branch
                  %899 = sbr.rel (%p897) target = $region93
                $region90: #{tpu_custom_call.1} parent=78 // loop_body
                  %v903 = vld [vmem:[%s901] sm:%s894]
                  %904 = vst [vmem:[%s902] sm:%s894] %v903
                  %v905 = vld [vmem:[%s901 + $0x4] sm:%s894]
                  %906 = vst [vmem:[%s902 + $0x4] sm:%s894] %v905
                  %v907 = vld [vmem:[%s901 + $0x8] sm:%s894]
                  %908 = vst [vmem:[%s902 + $0x10] sm:%s894] %v907
                  %v909 = vld [vmem:[%s901 + $0xc] sm:%s894]
                  %910 = vst [vmem:[%s902 + $0x14] sm:%s894] %v909
                $region91: #{tpu_custom_call.1} parent=78 // loop_footer
                  %s900 = sadd.s32 1, %s896
                $region92: #{tpu_custom_call.1} parent=78 // loop_footer_branch
                  %895 = sbr.rel target = $region88
                $region93: #{tpu_custom_call.1} parent=78 // loop_exit
                  _
              $region79: #{tpu_custom_call.1} parent=63 // pred_fallthru
                _
            $region64: #{tpu_custom_call.1} parent=59 // pred_fallthru
              _
            // Predicated region
            $region65: #{tpu_custom_call.1} parent=59 // pred_check
              _
            $region66: #{tpu_custom_call.1} parent=59 // pred_check_branch
              %864 = sbr.rel (0) target = $region68
            $region67: #{tpu_custom_call.1} parent=59 // pred_region
              %s866 = ssub.s32 16, 1
              loop: start=0, step=1, limit=1
              $region69: #{tpu_custom_call.1} parent=67 // loop_pre_header
                _
              $region70: #{tpu_custom_call.1} parent=67 // loop_header
                %s868 = sphi 0, %s872
                %p869 = scmp.ge.s32.totalorder %s868, 1
                %s873 = sphi %s842, %s842
                %s874 = sphi %s858, %s858
              $region71: #{tpu_custom_call.1} parent=67 // loop_header_branch
                %871 = sbr.rel (%p869) target = $region75
              $region72: #{tpu_custom_call.1} parent=67 // loop_body
                %v875 = vld [vmem:[%s873] sm:%s866]
                %876 = vst [vmem:[%s874] sm:%s866] %v875
                %v877 = vld [vmem:[%s873 + $0x4] sm:%s866]
                %878 = vst [vmem:[%s874 + $0x4] sm:%s866] %v877
                %v879 = vld [vmem:[%s873 + $0x8] sm:%s866]
                %880 = vst [vmem:[%s874 + $0x10] sm:%s866] %v879
                %v881 = vld [vmem:[%s873 + $0xc] sm:%s866]
                %882 = vst [vmem:[%s874 + $0x14] sm:%s866] %v881
              $region73: #{tpu_custom_call.1} parent=67 // loop_footer
                %s872 = sadd.s32 1, %s868
              $region74: #{tpu_custom_call.1} parent=67 // loop_footer_branch
                %867 = sbr.rel target = $region70
              $region75: #{tpu_custom_call.1} parent=67 // loop_exit
                _
            $region68: #{tpu_custom_call.1} parent=59 // pred_fallthru
              _
          $region60: #{tpu_custom_call.1} parent=55 // pred_fallthru
            _
          %911 = vnop
        $region56: #{tpu_custom_call.1} parent=43 // pred_fallthru
          _
        // Predicated region
        $region94: #{tpu_custom_call.1} parent=43 // pred_check
          %p912 = pneg %p217
        $region95: #{tpu_custom_call.1} parent=43 // pred_check_branch
          %914 = sbr.rel (%p912) target = $region97
        $region96: #{tpu_custom_call.1} parent=43 // pred_region
          %s915 = smul.u32 2, %s29
          %s916 = smul.addr %s28, 8
          %s917 = sadd.s32 %s915, %s916
          %s918 = smul.addr %s917, 4
          %s919 = scalar_lea.vmem %s7, %s918
          // Predicated region
          $region98: #{tpu_custom_call.1} parent=96 // pred_check
            _
          $region99: #{tpu_custom_call.1} parent=96 // pred_check_branch
            %921 = sbr.rel (0) target = $region101
          $region100: #{tpu_custom_call.1} parent=96 // pred_region
            // Predicated region
            $region102: #{tpu_custom_call.1} parent=100 // pred_check
              _
            $region103: #{tpu_custom_call.1} parent=100 // pred_check_branch
              %923 = sbr.rel target = $region105
            $region104: #{tpu_custom_call.1} parent=100 // pred_region
              // Predicated region
              $region117: #{tpu_custom_call.1} parent=104 // pred_check
                _
              $region118: #{tpu_custom_call.1} parent=104 // pred_check_branch
                %945 = sbr.rel (0) target = $region120
              $region119: #{tpu_custom_call.1} parent=104 // pred_region
                loop: start=0, step=1, limit=1
                $region121: #{tpu_custom_call.1} parent=119 // loop_pre_header
                  _
                $region122: #{tpu_custom_call.1} parent=119 // loop_header
                  %s947 = sphi 0, %s951
                  %p948 = scmp.ge.s32.totalorder %s947, 1
                  %s952 = sphi %s846, %s846
                  %s953 = sphi %s919, %s919
                $region123: #{tpu_custom_call.1} parent=119 // loop_header_branch
                  %950 = sbr.rel (%p948) target = $region127
                $region124: #{tpu_custom_call.1} parent=119 // loop_body
                  _
                $region125: #{tpu_custom_call.1} parent=119 // loop_footer
                  %s951 = sadd.s32 1, %s947
                $region126: #{tpu_custom_call.1} parent=119 // loop_footer_branch
                  %946 = sbr.rel target = $region122
                $region127: #{tpu_custom_call.1} parent=119 // loop_exit
                  _
                %s955 = ssub.s32 16, 1
                loop: start=0, step=1, limit=1
                $region128: #{tpu_custom_call.1} parent=119 // loop_pre_header
                  _
                $region129: #{tpu_custom_call.1} parent=119 // loop_header
                  %s957 = sphi 0, %s961
                  %p958 = scmp.ge.s32.totalorder %s957, 1
                  %s962 = sphi %s846, %s846
                  %s963 = sphi %s919, %s919
                $region130: #{tpu_custom_call.1} parent=119 // loop_header_branch
                  %960 = sbr.rel (%p958) target = $region134
                $region131: #{tpu_custom_call.1} parent=119 // loop_body
                  %v964 = vld [vmem:[%s962] sm:%s955]
                  %965 = vst [vmem:[%s963] sm:%s955] %v964
                  %v966 = vld [vmem:[%s962 + $0x4] sm:%s955]
                  %967 = vst [vmem:[%s963 + $0x4] sm:%s955] %v966
                  %v968 = vld [vmem:[%s962 + $0x8] sm:%s955]
                  %969 = vst [vmem:[%s963 + $0x10] sm:%s955] %v968
                  %v970 = vld [vmem:[%s962 + $0xc] sm:%s955]
                  %971 = vst [vmem:[%s963 + $0x14] sm:%s955] %v970
                $region132: #{tpu_custom_call.1} parent=119 // loop_footer
                  %s961 = sadd.s32 1, %s957
                $region133: #{tpu_custom_call.1} parent=119 // loop_footer_branch
                  %956 = sbr.rel target = $region129
                $region134: #{tpu_custom_call.1} parent=119 // loop_exit
                  _
              $region120: #{tpu_custom_call.1} parent=104 // pred_fallthru
                _
            $region105: #{tpu_custom_call.1} parent=100 // pred_fallthru
              _
            // Predicated region
            $region106: #{tpu_custom_call.1} parent=100 // pred_check
              _
            $region107: #{tpu_custom_call.1} parent=100 // pred_check_branch
              %925 = sbr.rel (0) target = $region109
            $region108: #{tpu_custom_call.1} parent=100 // pred_region
              %s927 = ssub.s32 16, 1
              loop: start=0, step=1, limit=1
              $region110: #{tpu_custom_call.1} parent=108 // loop_pre_header
                _
              $region111: #{tpu_custom_call.1} parent=108 // loop_header
                %s929 = sphi 0, %s933
                %p930 = scmp.ge.s32.totalorder %s929, 1
                %s934 = sphi %s846, %s846
                %s935 = sphi %s919, %s919
              $region112: #{tpu_custom_call.1} parent=108 // loop_header_branch
                %932 = sbr.rel (%p930) target = $region116
              $region113: #{tpu_custom_call.1} parent=108 // loop_body
                %v936 = vld [vmem:[%s934] sm:%s927]
                %937 = vst [vmem:[%s935] sm:%s927] %v936
                %v938 = vld [vmem:[%s934 + $0x4] sm:%s927]
                %939 = vst [vmem:[%s935 + $0x4] sm:%s927] %v938
                %v940 = vld [vmem:[%s934 + $0x8] sm:%s927]
                %941 = vst [vmem:[%s935 + $0x10] sm:%s927] %v940
                %v942 = vld [vmem:[%s934 + $0xc] sm:%s927]
                %943 = vst [vmem:[%s935 + $0x14] sm:%s927] %v942
              $region114: #{tpu_custom_call.1} parent=108 // loop_footer
                %s933 = sadd.s32 1, %s929
              $region115: #{tpu_custom_call.1} parent=108 // loop_footer_branch
                %928 = sbr.rel target = $region111
              $region116: #{tpu_custom_call.1} parent=108 // loop_exit
                _
            $region109: #{tpu_custom_call.1} parent=100 // pred_fallthru
              _
          $region101: #{tpu_custom_call.1} parent=96 // pred_fallthru
            _
          %972 = vnop
        $region97: #{tpu_custom_call.1} parent=43 // pred_fallthru
          _
        // Predicated region
        $region135: #{tpu_custom_call.1} parent=43 // pred_check
          %p973 = pneg %p245
        $region136: #{tpu_custom_call.1} parent=43 // pred_check_branch
          %975 = sbr.rel (%p973) target = $region138
        $region137: #{tpu_custom_call.1} parent=43 // pred_region
          %s976 = smul.u32 2, %s29
          %s977 = smul.addr %s28, 8
          %s978 = sadd.s32 %s976, %s977
          %s979 = smul.addr %s978, 4
          %s980 = scalar_lea.vmem %s8, %s979
          // Predicated region
          $region139: #{tpu_custom_call.1} parent=137 // pred_check
            _
          $region140: #{tpu_custom_call.1} parent=137 // pred_check_branch
            %982 = sbr.rel (0) target = $region142
          $region141: #{tpu_custom_call.1} parent=137 // pred_region
            // Predicated region
            $region143: #{tpu_custom_call.1} parent=141 // pred_check
              _
            $region144: #{tpu_custom_call.1} parent=141 // pred_check_branch
              %984 = sbr.rel target = $region146
            $region145: #{tpu_custom_call.1} parent=141 // pred_region
              // Predicated region
              $region158: #{tpu_custom_call.1} parent=145 // pred_check
                _
              $region159: #{tpu_custom_call.1} parent=145 // pred_check_branch
                %1006 = sbr.rel (0) target = $region161
              $region160: #{tpu_custom_call.1} parent=145 // pred_region
                loop: start=0, step=1, limit=1
                $region162: #{tpu_custom_call.1} parent=160 // loop_pre_header
                  _
                $region163: #{tpu_custom_call.1} parent=160 // loop_header
                  %s1008 = sphi 0, %s1012
                  %p1009 = scmp.ge.s32.totalorder %s1008, 1
                  %s1013 = sphi %s850, %s850
                  %s1014 = sphi %s980, %s980
                $region164: #{tpu_custom_call.1} parent=160 // loop_header_branch
                  %1011 = sbr.rel (%p1009) target = $region168
                $region165: #{tpu_custom_call.1} parent=160 // loop_body
                  _
                $region166: #{tpu_custom_call.1} parent=160 // loop_footer
                  %s1012 = sadd.s32 1, %s1008
                $region167: #{tpu_custom_call.1} parent=160 // loop_footer_branch
                  %1007 = sbr.rel target = $region163
                $region168: #{tpu_custom_call.1} parent=160 // loop_exit
                  _
                %s1016 = ssub.s32 16, 1
                loop: start=0, step=1, limit=1
                $region169: #{tpu_custom_call.1} parent=160 // loop_pre_header
                  _
                $region170: #{tpu_custom_call.1} parent=160 // loop_header
                  %s1018 = sphi 0, %s1022
                  %p1019 = scmp.ge.s32.totalorder %s1018, 1
                  %s1023 = sphi %s850, %s850
                  %s1024 = sphi %s980, %s980
                $region171: #{tpu_custom_call.1} parent=160 // loop_header_branch
                  %1021 = sbr.rel (%p1019) target = $region175
                $region172: #{tpu_custom_call.1} parent=160 // loop_body
                  %v1025 = vld [vmem:[%s1023] sm:%s1016]
                  %1026 = vst [vmem:[%s1024] sm:%s1016] %v1025
                  %v1027 = vld [vmem:[%s1023 + $0x4] sm:%s1016]
                  %1028 = vst [vmem:[%s1024 + $0x4] sm:%s1016] %v1027
                  %v1029 = vld [vmem:[%s1023 + $0x8] sm:%s1016]
                  %1030 = vst [vmem:[%s1024 + $0x10] sm:%s1016] %v1029
                  %v1031 = vld [vmem:[%s1023 + $0xc] sm:%s1016]
                  %1032 = vst [vmem:[%s1024 + $0x14] sm:%s1016] %v1031
                $region173: #{tpu_custom_call.1} parent=160 // loop_footer
                  %s1022 = sadd.s32 1, %s1018
                $region174: #{tpu_custom_call.1} parent=160 // loop_footer_branch
                  %1017 = sbr.rel target = $region170
                $region175: #{tpu_custom_call.1} parent=160 // loop_exit
                  _
              $region161: #{tpu_custom_call.1} parent=145 // pred_fallthru
                _
            $region146: #{tpu_custom_call.1} parent=141 // pred_fallthru
              _
            // Predicated region
            $region147: #{tpu_custom_call.1} parent=141 // pred_check
              _
            $region148: #{tpu_custom_call.1} parent=141 // pred_check_branch
              %986 = sbr.rel (0) target = $region150
            $region149: #{tpu_custom_call.1} parent=141 // pred_region
              %s988 = ssub.s32 16, 1
              loop: start=0, step=1, limit=1
              $region151: #{tpu_custom_call.1} parent=149 // loop_pre_header
                _
              $region152: #{tpu_custom_call.1} parent=149 // loop_header
                %s990 = sphi 0, %s994
                %p991 = scmp.ge.s32.totalorder %s990, 1
                %s995 = sphi %s850, %s850
                %s996 = sphi %s980, %s980
              $region153: #{tpu_custom_call.1} parent=149 // loop_header_branch
                %993 = sbr.rel (%p991) target = $region157
              $region154: #{tpu_custom_call.1} parent=149 // loop_body
                %v997 = vld [vmem:[%s995] sm:%s988]
                %998 = vst [vmem:[%s996] sm:%s988] %v997
                %v999 = vld [vmem:[%s995 + $0x4] sm:%s988]
                %1000 = vst [vmem:[%s996 + $0x4] sm:%s988] %v999
                %v1001 = vld [vmem:[%s995 + $0x8] sm:%s988]
                %1002 = vst [vmem:[%s996 + $0x10] sm:%s988] %v1001
                %v1003 = vld [vmem:[%s995 + $0xc] sm:%s988]
                %1004 = vst [vmem:[%s996 + $0x14] sm:%s988] %v1003
              $region155: #{tpu_custom_call.1} parent=149 // loop_footer
                %s994 = sadd.s32 1, %s990
              $region156: #{tpu_custom_call.1} parent=149 // loop_footer_branch
                %989 = sbr.rel target = $region152
              $region157: #{tpu_custom_call.1} parent=149 // loop_exit
                _
            $region150: #{tpu_custom_call.1} parent=141 // pred_fallthru
              _
          $region142: #{tpu_custom_call.1} parent=137 // pred_fallthru
            _
          %1033 = vnop
        $region138: #{tpu_custom_call.1} parent=43 // pred_fallthru
          _
      $region44: #{tpu_custom_call.1} parent=5 // pred_fallthru
        _
      %p1034 = scmp.le.s32.totalorder 2, %s19
      // Predicated region
      $region176: #{tpu_custom_call.1} parent=5 // pred_check
        %p1035 = pneg %p1034
      $region177: #{tpu_custom_call.1} parent=5 // pred_check_branch
        %1037 = sbr.rel (%p1035) target = $region179
      $region178: #{tpu_custom_call.1} parent=5 // pred_region
        %s1038 = ssub.s32 %s19, 2
        // Predicated region
        $region180: #{tpu_custom_call.1} parent=178 // pred_check
          %p1039 = pneg %p195
        $region181: #{tpu_custom_call.1} parent=178 // pred_check_branch
          %1041 = sbr.rel (%p1039) target = $region183
        $region182: #{tpu_custom_call.1} parent=178 // pred_region
          %s1042 = sand.u32 %s180, 1
          %s1043 = sand.u32 %s180, 1
          %s1044 = smul.addr %s1043, 16
          %s1045 = scalar_lea.vmem [#allocation6], %s1044
        $region183: #{tpu_custom_call.1} parent=178 // pred_fallthru
          _
        // Predicated region
        $region184: #{tpu_custom_call.1} parent=178 // pred_check
          %p1046 = pneg %p223
        $region185: #{tpu_custom_call.1} parent=178 // pred_check_branch
          %1048 = sbr.rel (%p1046) target = $region187
        $region186: #{tpu_custom_call.1} parent=178 // pred_region
          %s1049 = sand.u32 %s208, 1
          %s1050 = sand.u32 %s208, 1
          %s1051 = smul.addr %s1050, 16
          %s1052 = scalar_lea.vmem [#allocation7], %s1051
        $region187: #{tpu_custom_call.1} parent=178 // pred_fallthru
          _
        // Predicated region
        $region188: #{tpu_custom_call.1} parent=178 // pred_check
          %p1053 = pneg %p251
        $region189: #{tpu_custom_call.1} parent=178 // pred_check_branch
          %1055 = sbr.rel (%p1053) target = $region191
        $region190: #{tpu_custom_call.1} parent=178 // pred_region
          %s1056 = sand.u32 %s236, 1
          %s1057 = sand.u32 %s236, 1
          %s1058 = smul.addr %s1057, 16
          %s1059 = scalar_lea.vmem [#allocation8], %s1058
        $region191: #{tpu_custom_call.1} parent=178 // pred_fallthru
          _
      $region179: #{tpu_custom_call.1} parent=5 // pred_fallthru
        _
    $region6: #{tpu_custom_call.1} parent=1 // loop_footer
      %s23 = sadd.s32 1, %s19
    $region7: #{tpu_custom_call.1} parent=1 // loop_footer_branch
      %18 = sbr.rel target = $region3
    $region8: #{tpu_custom_call.1} parent=1 // loop_exit
      _
    %1060 = vsyncpa [#allocation3], 1
    %s1061 = scalar_lea.sflag [#allocation3], 1
    %1062 = vsyncpa %s1061, 1
    %1063 = vsyncpa [#allocation5], 1

// kernel: tpu_custom_call.1
$region0: #{tpu_custom_call.1}
  #allocation0 [shape = 'u32[]', space=smem, size = 0x4, offset = 0x4, fixed_abs, tag = 'smem constant byte address 0x4 - core index']
  #allocation1 [shape = 'u32[72,128]{1,0:T(1,128)}', space=vmem, size = 0x9000, scoped, tag = 'internal scratch']
  %s0 = inlined_call_operand.hbm [shape: f32[2,32,32], index: 0, kind: input, shape index: {}]
  %s1 = inlined_call_operand.hbm [shape: bf16[32,96], index: 1, kind: input, shape index: {}]
  %s2 = inlined_call_operand.vmem [shape: f32[1,32], index: 2, kind: input, shape index: {}]
  %s3 = inlined_call_operand.vmem [shape: f32[1,32], index: 3, kind: input, shape index: {}]
  %s4 = inlined_call_operand.vmem [shape: f32[1,1,16], index: 4, kind: input, shape index: {}]
  %s5 = inlined_call_operand.vmem [shape: f32[1,1,16], index: 5, kind: input, shape index: {}]
  %s6 = inlined_call_operand.vmem [shape: bf16[2,2,32,16], index: 6, kind: output, shape index: {0}]
  %s7 = inlined_call_operand.vmem [shape: bf16[2,2,32,16], index: 7, kind: output, shape index: {1}]
  %s8 = inlined_call_operand.vmem [shape: bf16[2,2,32,16], index: 8, kind: output, shape index: {2}]
  %9 = xla_tuple %s6, %s7, %s8
  %s10 = sld [smem:[#allocation0]]
  $region192: #{tpu_custom_call.1} parent=0
    _
  %s12 = ssub.s32 1, %s10
  %s13 = scalar_select 0, %s12, %s10
  $region1: #{tpu_custom_call.1} parent=0
    #allocation2 [shape = 'u8[16384]{0}', space=vmem, size = 0x4000, scoped, tag = 'input window, operand 0']
    #allocation3 [shape = 's32[2]{0}', space=sflag, size = 0x8, scoped, tag = 'scoped memory for tpu_custom_call.1']
    #allocation4 [shape = 'u8[8192]{0}', space=vmem, size = 0x2000, scoped, tag = 'input window, operand 1, single buffered']
    #allocation5 [shape = 's32[1]{0}', space=sflag, size = 0x4, scoped, tag = 'scoped memory for tpu_custom_call.1']
    #allocation6 [shape = 'u8[16384]{0}', space=vmem, size = 0x4000, scoped, tag = 'output window, operand 0']
    #allocation7 [shape = 'u8[16384]{0}', space=vmem, size = 0x4000, scoped, tag = 'output window, operand 1']
    #allocation8 [shape = 'u8[16384]{0}', space=vmem, size = 0x4000, scoped, tag = 'output window, operand 2']
    %14 = vsyncpa [#allocation3], 0
    %s15 = scalar_lea.sflag [#allocation3], 1
    %16 = vsyncpa %s15, 0
    %17 = vsyncpa [#allocation5], 0
    loop: start=0, step=1, limit=6
    $region2: #{tpu_custom_call.1} parent=1 // loop_pre_header
      _
    $region3: #{tpu_custom_call.1} parent=1 // loop_header
      %s19 = sphi 0, %s23
      %p20 = scmp.ge.s32.totalorder %s19, 6
      %s26 = sphi 0, %s38
      %s27 = sphi 0, %s34
      %s28 = sphi 0, %s26
      %s29 = sphi 0, %s27
      %s30 = sphi 0, %s28
      %s31 = sphi 0, %s29
      %s43 = sphi 0, %s45
      %s46 = sphi 0, %s43
      %s47 = sphi 0, %s46
      %s63 = sphi 0, %s47
      %s67 = sphi 0, %s67
      %s69 = sphi 0, %s67
      %s70 = sphi 0, %s69
      %s84 = sphi 0, %s70
      %s88 = sphi 0, %s88
      %s90 = sphi 0, %s88
      %s91 = sphi 0, %s90
      %s105 = sphi 0, %s91
      %s109 = sphi 0, %s109
      %s111 = sphi 0, %s109
      %s112 = sphi 0, %s111
      %s126 = sphi 0, %s112
      %s130 = sphi 0, %s130
      %s132 = sphi 0, %s130
      %s133 = sphi 0, %s132
      %s147 = sphi 0, %s133
      %s151 = sphi 0, %s151
      %s153 = sphi 0, %s151
      %s154 = sphi 0, %s153
      %s168 = sphi 0, %s154
      %s176 = sphi 0, %s178
      %s179 = sphi 0, %s176
      %s180 = sphi 0, %s179
      %s196 = sphi 0, %s180
      %s204 = sphi 0, %s206
      %s207 = sphi 0, %s204
      %s208 = sphi 0, %s207
      %s224 = sphi 0, %s208
      %s232 = sphi 0, %s234
      %s235 = sphi 0, %s232
      %s236 = sphi 0, %s235
      %s252 = sphi 0, %s236
    $region4: #{tpu_custom_call.1} parent=1 // loop_header_branch
      %22 = sbr.rel (%p20) target = $region8
    $region5: #{tpu_custom_call.1} parent=1 // loop_body
      %s24 = ssub.s32 %s19, 1
      %s25 = ssub.s32 %s19, 2
      %s32 = sadd.s32 1, %s27
      %p33 = scmp.ge.s32.totalorder %s32, 2
      %s34 = scalar_select %p33, 0, %s32
      %s35 = sadd.s32 1, %s26
      %s36 = scalar_select %p33, %s35, %s26
      %p37 = scmp.ge.s32.totalorder %s36, 2
      %s38 = scalar_select %p37, 0, %s36
      %s39 = ssub.s32 %s26, %s38
      %s40 = ssub.s32 %s27, %s34
      %s41 = sor.u32 %s39, %s40
      %p42 = scmp.eq.s32.totalorder %s41, 0
      %s44 = sadd.s32 %s43, 1
      %s45 = scalar_select %p42, %s43, %s44
      %p48 = pneg %p42
      %p49 = scmp.eq.s32.totalorder %s19, 3
      %p50 = por %p48, %p49
      %p51 = scmp.ne.s32.totalorder %s43, %s46
      %p52 = scmp.eq.s32.totalorder %s19, 0
      %p53 = por %p51, %p52
      %p54 = scmp.ne.s32.totalorder %s43, %s46
      %p55 = scmp.eq.s32.totalorder %s24, 3
      %p56 = por %p54, %p55
      %p57 = scmp.ne.s32.totalorder %s46, %s47
      %p58 = scmp.eq.s32.totalorder %s24, 0
      %p59 = por %p57, %p58
      %p60 = scmp.ne.s32.totalorder %s46, %s47
      %p61 = scmp.eq.s32.totalorder %s25, 3
      %p62 = por %p60, %p61
      %p64 = scmp.ne.s32.totalorder %s47, %s63
      %p65 = scmp.eq.s32.totalorder %s25, 0
      %p66 = por %p64, %p65
      %s68 = sadd.s32 %s67, 1
      %p71 = scmp.eq.s32.totalorder %s19, 3
      %p72 = scmp.ne.s32.totalorder %s67, %s69
      %p73 = scmp.eq.s32.totalorder %s19, 0
      %p74 = por %p72, %p73
      %p75 = scmp.ne.s32.totalorder %s67, %s69
      %p76 = scmp.eq.s32.totalorder %s24, 3
      %p77 = por %p75, %p76
      %p78 = scmp.ne.s32.totalorder %s69, %s70
      %p79 = scmp.eq.s32.totalorder %s24, 0
      %p80 = por %p78, %p79
      %p81 = scmp.ne.s32.totalorder %s69, %s70
      %p82 = scmp.eq.s32.totalorder %s25, 3
      %p83 = por %p81, %p82
      %p85 = scmp.ne.s32.totalorder %s70, %s84
      %p86 = scmp.eq.s32.totalorder %s25, 0
      %p87 = por %p85, %p86
      %s89 = sadd.s32 %s88, 1
      %p92 = scmp.eq.s32.totalorder %s19, 3
      %p93 = scmp.ne.s32.totalorder %s88, %s90
      %p94 = scmp.eq.s32.totalorder %s19, 0
      %p95 = por %p93, %p94
      %p96 = scmp.ne.s32.totalorder %s88, %s90
      %p97 = scmp.eq.s32.totalorder %s24, 3
      %p98 = por %p96, %p97
      %p99 = scmp.ne.s32.totalorder %s90, %s91
      %p100 = scmp.eq.s32.totalorder %s24, 0
      %p101 = por %p99, %p100
      %p102 = scmp.ne.s32.totalorder %s90, %s91
      %p103 = scmp.eq.s32.totalorder %s25, 3
      %p104 = por %p102, %p103
      %p106 = scmp.ne.s32.totalorder %s91, %s105
      %p107 = scmp.eq.s32.totalorder %s25, 0
      %p108 = por %p106, %p107
      %s110 = sadd.s32 %s109, 1
      %p113 = scmp.eq.s32.totalorder %s19, 3
      %p114 = scmp.ne.s32.totalorder %s109, %s111
      %p115 = scmp.eq.s32.totalorder %s19, 0
      %p116 = por %p114, %p115
      %p117 = scmp.ne.s32.totalorder %s109, %s111
      %p118 = scmp.eq.s32.totalorder %s24, 3
      %p119 = por %p117, %p118
      %p120 = scmp.ne.s32.totalorder %s111, %s112
      %p121 = scmp.eq.s32.totalorder %s24, 0
      %p122 = por %p120, %p121
      %p123 = scmp.ne.s32.totalorder %s111, %s112
      %p124 = scmp.eq.s32.totalorder %s25, 3
      %p125 = por %p123, %p124
      %p127 = scmp.ne.s32.totalorder %s112, %s126
      %p128 = scmp.eq.s32.totalorder %s25, 0
      %p129 = por %p127, %p128
      %s131 = sadd.s32 %s130, 1
      %p134 = scmp.eq.s32.totalorder %s19, 3
      %p135 = scmp.ne.s32.totalorder %s130, %s132
      %p136 = scmp.eq.s32.totalorder %s19, 0
      %p137 = por %p135, %p136
      %p138 = scmp.ne.s32.totalorder %s130, %s132
      %p139 = scmp.eq.s32.totalorder %s24, 3
      %p140 = por %p138, %p139
      %p141 = scmp.ne.s32.totalorder %s132, %s133
      %p142 = scmp.eq.s32.totalorder %s24, 0
      %p143 = por %p141, %p142
      %p144 = scmp.ne.s32.totalorder %s132, %s133
      %p145 = scmp.eq.s32.totalorder %s25, 3
      %p146 = por %p144, %p145
      %p148 = scmp.ne.s32.totalorder %s133, %s147
      %p149 = scmp.eq.s32.totalorder %s25, 0
      %p150 = por %p148, %p149
      %s152 = sadd.s32 %s151, 1
      %p155 = scmp.eq.s32.totalorder %s19, 3
      %p156 = scmp.ne.s32.totalorder %s151, %s153
      %p157 = scmp.eq.s32.totalorder %s19, 0
      %p158 = por %p156, %p157
      %p159 = scmp.ne.s32.totalorder %s151, %s153
      %p160 = scmp.eq.s32.totalorder %s24, 3
      %p161 = por %p159, %p160
      %p162 = scmp.ne.s32.totalorder %s153, %s154
      %p163 = scmp.eq.s32.totalorder %s24, 0
      %p164 = por %p162, %p163
      %p165 = scmp.ne.s32.totalorder %s153, %s154
      %p166 = scmp.eq.s32.totalorder %s25, 3
      %p167 = por %p165, %p166
      %p169 = scmp.ne.s32.totalorder %s154, %s168
      %p170 = scmp.eq.s32.totalorder %s25, 0
      %p171 = por %p169, %p170
      %s172 = ssub.s32 %s26, %s38
      %s173 = ssub.s32 %s27, %s34
      %s174 = sor.u32 %s172, %s173
      %p175 = scmp.eq.s32.totalorder %s174, 0
      %s177 = sadd.s32 %s176, 1
      %s178 = scalar_select %p175, %s176, %s177
      %p181 = pneg %p175
      %p182 = scmp.eq.s32.totalorder %s19, 3
      %p183 = por %p181, %p182
      %p184 = scmp.ne.s32.totalorder %s176, %s179
      %p185 = scmp.eq.s32.totalorder %s19, 0
      %p186 = por %p184, %p185
      %p187 = scmp.ne.s32.totalorder %s176, %s179
      %p188 = scmp.eq.s32.totalorder %s24, 3
      %p189 = por %p187, %p188
      %p190 = scmp.ne.s32.totalorder %s179, %s180
      %p191 = scmp.eq.s32.totalorder %s24, 0
      %p192 = por %p190, %p191
      %p193 = scmp.ne.s32.totalorder %s179, %s180
      %p194 = scmp.eq.s32.totalorder %s25, 3
      %p195 = por %p193, %p194
      %p197 = scmp.ne.s32.totalorder %s180, %s196
      %p198 = scmp.eq.s32.totalorder %s25, 0
      %p199 = por %p197, %p198
      %s200 = ssub.s32 %s26, %s38
      %s201 = ssub.s32 %s27, %s34
      %s202 = sor.u32 %s200, %s201
      %p203 = scmp.eq.s32.totalorder %s202, 0
      %s205 = sadd.s32 %s204, 1
      %s206 = scalar_select %p203, %s204, %s205
      %p209 = pneg %p203
      %p210 = scmp.eq.s32.totalorder %s19, 3
      %p211 = por %p209, %p210
      %p212 = scmp.ne.s32.totalorder %s204, %s207
      %p213 = scmp.eq.s32.totalorder %s19, 0
      %p214 = por %p212, %p213
      %p215 = scmp.ne.s32.totalorder %s204, %s207
      %p216 = scmp.eq.s32.totalorder %s24, 3
      %p217 = por %p215, %p216
      %p218 = scmp.ne.s32.totalorder %s207, %s208
      %p219 = scmp.eq.s32.totalorder %s24, 0
      %p220 = por %p218, %p219
      %p221 = scmp.ne.s32.totalorder %s207, %s208
      %p222 = scmp.eq.s32.totalorder %s25, 3
      %p223 = por %p221, %p222
      %p225 = scmp.ne.s32.totalorder %s208, %s224
      %p226 = scmp.eq.s32.totalorder %s25, 0
      %p227 = por %p225, %p226
      %s228 = ssub.s32 %s26, %s38
      %s229 = ssub.s32 %s27, %s34
      %s230 = sor.u32 %s228, %s229
      %p231 = scmp.eq.s32.totalorder %s230, 0
      %s233 = sadd.s32 %s232, 1
      %s234 = scalar_select %p231, %s232, %s233
      %p237 = pneg %p231
      %p238 = scmp.eq.s32.totalorder %s19, 3
      %p239 = por %p237, %p238
      %p240 = scmp.ne.s32.totalorder %s232, %s235
      %p241 = scmp.eq.s32.totalorder %s19, 0
      %p242 = por %p240, %p241
      %p243 = scmp.ne.s32.totalorder %s232, %s235
      %p244 = scmp.eq.s32.totalorder %s24, 3
      %p245 = por %p243, %p244
      %p246 = scmp.ne.s32.totalorder %s235, %s236
      %p247 = scmp.eq.s32.totalorder %s24, 0
      %p248 = por %p246, %p247
      %p249 = scmp.ne.s32.totalorder %s235, %s236
      %p250 = scmp.eq.s32.totalorder %s25, 3
      %p251 = por %p249, %p250
      %p253 = scmp.ne.s32.totalorder %s236, %s252
      %p254 = scmp.eq.s32.totalorder %s25, 0
      %p255 = por %p253, %p254
      %p256 = scmp.le.s32.totalorder 1, %s19
      %p257 = scmp.lt.s32.totalorder %s19, 5
      %p258 = pnand %p256, %p257
      %p259 = pneg %p258
      // Predicated region
      $region9: #{tpu_custom_call.1} parent=5 // pred_check
        _
      $region10: #{tpu_custom_call.1} parent=5 // pred_check_branch
        %261 = sbr.rel (%p258) target = $region12
      $region11: #{tpu_custom_call.1} parent=5 // pred_region
        %s262 = ssub.s32 %s19, 1
        // Predicated region
        $region13: #{tpu_custom_call.1} parent=11 // pred_check
          %p263 = pneg %p80
        $region14: #{tpu_custom_call.1} parent=11 // pred_check_branch
          %265 = sbr.rel (%p263) target = $region16
        $region15: #{tpu_custom_call.1} parent=11 // pred_region
          %267 = vsyncadd [#allocation5], 0
          %s268 = sshll.u32 %s1, 4
          %s269 = int_to_ptr.hbm [resolvable:$true] %s268
          %s270 = sshll.u32 [#allocation4], 4
          %s271 = int_to_ptr.vmem [resolvable:$true] %s270
          %276 = dma.hbm_to_vmem [thread:$0]  %s269, 256, %s271, [#allocation5], 64, 64, 4
        $region16: #{tpu_custom_call.1} parent=11 // pred_fallthru
          _
        // Predicated region
        $region17: #{tpu_custom_call.1} parent=11 // pred_check
          %p277 = pneg %p101
        $region18: #{tpu_custom_call.1} parent=11 // pred_check_branch
          %279 = sbr.rel (%p277) target = $region20
        $region19: #{tpu_custom_call.1} parent=11 // pred_region
          _
        $region20: #{tpu_custom_call.1} parent=11 // pred_fallthru
          _
        // Predicated region
        $region21: #{tpu_custom_call.1} parent=11 // pred_check
          %p280 = pneg %p122
        $region22: #{tpu_custom_call.1} parent=11 // pred_check_branch
          %282 = sbr.rel (%p280) target = $region24
        $region23: #{tpu_custom_call.1} parent=11 // pred_region
          _
        $region24: #{tpu_custom_call.1} parent=11 // pred_fallthru
          _
        // Predicated region
        $region25: #{tpu_custom_call.1} parent=11 // pred_check
          %p283 = pneg %p143
        $region26: #{tpu_custom_call.1} parent=11 // pred_check_branch
          %285 = sbr.rel (%p283) target = $region28
        $region27: #{tpu_custom_call.1} parent=11 // pred_region
          _
        $region28: #{tpu_custom_call.1} parent=11 // pred_fallthru
          _
        // Predicated region
        $region29: #{tpu_custom_call.1} parent=11 // pred_check
          %p286 = pneg %p164
        $region30: #{tpu_custom_call.1} parent=11 // pred_check_branch
          %288 = sbr.rel (%p286) target = $region32
        $region31: #{tpu_custom_call.1} parent=11 // pred_region
          _
        $region32: #{tpu_custom_call.1} parent=11 // pred_fallthru
          _
      $region12: #{tpu_custom_call.1} parent=5 // pred_fallthru
        _
      %p289 = scmp.lt.s32.totalorder %s19, 4
      // Predicated region
      $region33: #{tpu_custom_call.1} parent=5 // pred_check
        %p290 = pneg %p289
      $region34: #{tpu_custom_call.1} parent=5 // pred_check_branch
        %292 = sbr.rel (%p290) target = $region36
      $region35: #{tpu_custom_call.1} parent=5 // pred_region
        // Predicated region
        $region37: #{tpu_custom_call.1} parent=35 // pred_check
          %p293 = pneg %p53
        $region38: #{tpu_custom_call.1} parent=35 // pred_check_branch
          %295 = sbr.rel (%p293) target = $region40
        $region39: #{tpu_custom_call.1} parent=35 // pred_region
          %s296 = sand.u32 %s43, 1
          %s297 = scalar_lea.sflag [#allocation3], %s296
          %s298 = sand.u32 %s43, 1
          %s299 = smul.addr %s298, 16
          %s300 = scalar_lea.vmem [#allocation2], %s299
          %s301 = smul.u32 2, %s27
          %303 = vsyncadd %s297, 0
          %s304 = smul.addr %s26, 4
          %s305 = sadd.s32 %s301, %s304
          %s306 = smul.addr %s305, 8
          %s307 = scalar_lea.hbm %s0, %s306
          %s308 = sshll.u32 %s307, 4
          %s309 = int_to_ptr.hbm [resolvable:$true] %s308
          %s310 = sshll.u32 %s300, 4
          %s311 = int_to_ptr.vmem [resolvable:$true] %s310
          %316 = dma.hbm_to_vmem [thread:$0]  %s309, 256, %s311, %s297, 128, 128, 8
        $region40: #{tpu_custom_call.1} parent=35 // pred_fallthru
          _
      $region36: #{tpu_custom_call.1} parent=5 // pred_fallthru
        _
      %p317 = scmp.le.s32.totalorder 1, %s19
      %p318 = scmp.lt.s32.totalorder %s19, 5
      %p319 = pnand %p317, %p318
      %p320 = pneg %p319
      // Predicated region
      $region41: #{tpu_custom_call.1} parent=5 // pred_check
        _
      $region42: #{tpu_custom_call.1} parent=5 // pred_check_branch
        %322 = sbr.rel (%p319) target = $region44
      $region43: #{tpu_custom_call.1} parent=5 // pred_region
        %s323 = ssub.s32 %s19, 1
        %s324 = sand.u32 %s46, 1
        %s325 = scalar_lea.sflag [#allocation3], %s324
        %s326 = sand.u32 %s46, 1
        %s327 = smul.addr %s326, 16
        %s328 = scalar_lea.vmem [#allocation2], %s327
        // Predicated region
        $region45: #{tpu_custom_call.1} parent=43 // pred_check
          %p329 = pneg %p59
        $region46: #{tpu_custom_call.1} parent=43 // pred_check_branch
          %331 = sbr.rel (%p329) target = $region48
        $region47: #{tpu_custom_call.1} parent=43 // pred_region
          %333 = dma.done %s325, 256
        $region48: #{tpu_custom_call.1} parent=43 // pred_fallthru
          _
        // Predicated region
        $region49: #{tpu_custom_call.1} parent=43 // pred_check
          %p334 = pneg %p80
        $region50: #{tpu_custom_call.1} parent=43 // pred_check_branch
          %336 = sbr.rel (%p334) target = $region52
        $region51: #{tpu_custom_call.1} parent=43 // pred_region
          %338 = dma.done [#allocation5], 256
        $region52: #{tpu_custom_call.1} parent=43 // pred_fallthru
          _
        %s339 = sand.u32 %s46, 1
        %s340 = scalar_lea.sflag [#allocation3], %s339
        %s341 = sand.u32 %s46, 1
        %s342 = smul.addr %s341, 16
        %s343 = scalar_lea.vmem [#allocation2], %s342
        %p344 = pneg %p59
        %p345 = pneg %p56
        %p346 = pneg %p80
        %p347 = pneg %p77
        %p348 = pneg %p101
        %p349 = pneg %p98
        %p350 = pneg %p122
        %p351 = pneg %p119
        %p352 = pneg %p143
        %p353 = pneg %p140
        %p354 = pneg %p164
        %p355 = pneg %p161
        %p356 = pneg %p192
        %p357 = pneg %p189
        %s358 = sand.u32 %s179, 1
        %s359 = sand.u32 %s179, 1
        %s360 = smul.addr %s359, 16
        %s361 = scalar_lea.vmem [#allocation6], %s360
        %p362 = pneg %p220
        %p363 = pneg %p217
        %s364 = sand.u32 %s207, 1
        %s365 = sand.u32 %s207, 1
        %s366 = smul.addr %s365, 16
        %s367 = scalar_lea.vmem [#allocation7], %s366
        %p368 = pneg %p248
        %p369 = pneg %p245
        %s370 = sand.u32 %s235, 1
        %s371 = sand.u32 %s235, 1
        %s372 = smul.addr %s371, 16
        %s373 = scalar_lea.vmem [#allocation8], %s372
        %s374 = smul.u32 2, %s29
        %s375 = smul.u32 2, %s29
        %s376 = smul.u32 2, %s29
        %s377 = smul.u32 2, %s29
        %v379 = vld [vmem:[%s328] sm:$0xff]
        %v380 = vld [vmem:[%s328 + $0x8] sm:$0xff]
        %vm381 = vcmask 261120
        %v382 = vsel %vm381, %v379, 0.0
        %383 = vadd.xlane.f32.xlu0 %v382
        %v384 = vpop.xlane.xlu0 %383
        %v385 = vsel %vm381, %v380, 0.0
        %386 = vadd.xlane.f32.xlu0 %v385
        %v387 = vpop.xlane.xlu0 %386
        %v388 = vrcp.pop 32.0
        %v389 = vmul.f32 32.0, %v388
        %v390 = vsub.f32 1.0, %v389
        %v391 = vmul.f32 %v388, %v390
        %v392 = vadd.f32 %v388, %v391
        %vm393 = vweird.f32 %v388
        %v394 = vsel %vm393, %v388, %v392
        %v395 = vmul.f32 %v384, %v394
        %v396 = vmul.f32 %v387, %v394
        %v397 = vsub.f32 %v379, %v395
        %v398 = vsub.f32 %v380, %v396
        %v399 = vmul.f32 %v397, %v397
        %v400 = vmul.f32 %v398, %v398
        %v401 = vsel %vm381, %v399, 0.0
        %402 = vadd.xlane.f32.xlu0 %v401
        %v403 = vpop.xlane.xlu0 %402
        %v404 = vsel %vm381, %v400, 0.0
        %405 = vadd.xlane.f32.xlu0 %v404
        %v406 = vpop.xlane.xlu0 %405
        %v407 = vmul.f32 %v403, %v394
        %v408 = vmul.f32 %v406, %v394
        %v409 = vadd.f32 %v407, 1e-05
        %v410 = vadd.f32 %v408, 1e-05
        %v411 = vrsqrt.pop %v409
        %v412 = vmul.f32 %v411, %v409
        %v413 = vmul.f32 %v412, %v411
        %v414 = vmul.f32 0.5, %v413
        %v415 = vsub.f32 1.5, %v414
        %v416 = vmul.f32 %v411, %v415
        %vm417 = vweird.f32 %v409
        %vm418 = vweird.f32 %v411
        %vm419 = vmor %vm417, %vm418
        %v420 = vsel %vm419, %v411, %v416
        %v421 = vrsqrt.pop %v410
        %v422 = vmul.f32 %v421, %v410
        %v423 = vmul.f32 %v422, %v421
        %v424 = vmul.f32 0.5, %v423
        %v425 = vsub.f32 1.5, %v424
        %v426 = vmul.f32 %v421, %v425
        %vm427 = vweird.f32 %v410
        %vm428 = vweird.f32 %v421
        %vm429 = vmor %vm427, %vm428
        %v430 = vsel %vm429, %v421, %v426
        %v431 = vmul.f32 %v397, %v420
        %v432 = vmul.f32 %v398, %v430
        %v433 = vld [vmem:[%s2] sm:$0x1]
        %v435 = vperm.slane %v433, 0
        %v437 = vmul.f32 %v431, %v435
        %v438 = vmul.f32 %v432, %v435
        %v439 = vld [vmem:[%s3] sm:$0x1]
        %v441 = vperm.slane %v439, 0
        %v443 = vadd.f32 %v437, %v441
        %v444 = vadd.f32 %v438, %v441
        %v445 = vpack.c.bf16 %v444, %v443
        %v446 = vld [vmem:[#allocation4] sm:$0xf]
        %v447 = vld [vmem:[#allocation4 + $0x4] sm:$0xf]
        %v448 = vld [vmem:[#allocation4 + $0x8] sm:$0xf]
        %v449 = vld [vmem:[#allocation4 + $0xc] sm:$0xf]
        %v454 = vunpack.c.l.b16 %v446
        %v455 = vunpack.c.l.b16 %v447
        %v456 = vunpack.c.l.b16 %v448
        %v457 = vunpack.c.l.b16 %v449
        %v458 = vpack.c.b16 %v455, %v454
        %v459 = vpack.c.b16 %v457, %v456
        %v463 = vsel %vm381, %v445, 0
        %465 = vmatpush.bf16.msra.mxu0 0
        %466 = vmatpush.bf16.msra.mxu0 0
        %467 = vmatpush.bf16.msra.mxu0 0
        %468 = vmatpush.bf16.msra.mxu0 0
        %469 = vmatpush.bf16.msra.mxu0 0
        %470 = vmatpush.bf16.msra.mxu0 0
        %471 = vmatpush.bf16.msra.mxu0 %v459
        %472 = vmatpush.bf16.msra.mxu0 %v458
        %473 = vmatmul.bf16.gmra.mxu0 %v463
        %v474 = vpop.f32.mrf.mxu0
        %v475 = vadd.f32 0.0, %v474
        %v476 = vpop.f32.mrf.mxu0
        %v477 = vadd.f32 0.0, %v476
        %478 = vdwg.mxu0
        %481 = vrot.lane.b32.xlu0 %v475, 112
        %v482 = vpop.permute.xlu0 %481
        %483 = vrot.lane.b32.xlu0 %v477, 112
        %v484 = vpop.permute.xlu0 %483
        %v487 = vmul.f32 %v475, %v475
        %v488 = vmul.f32 %v477, %v477
        %v489 = vmul.f32 %v482, %v482
        %v490 = vmul.f32 %v484, %v484
        %vm491 = vcmask 130048
        %v492 = vsel %vm491, %v487, 0.0
        %493 = vadd.xlane.f32.xlu0 %v492
        %v494 = vpop.xlane.xlu0 %493
        %v495 = vsel %vm491, %v488, 0.0
        %496 = vadd.xlane.f32.xlu0 %v495
        %v497 = vpop.xlane.xlu0 %496
        %v498 = vsel %vm491, %v489, 0.0
        %499 = vadd.xlane.f32.xlu0 %v498
        %v500 = vpop.xlane.xlu0 %499
        %v501 = vsel %vm491, %v490, 0.0
        %502 = vadd.xlane.f32.xlu0 %v501
        %v503 = vpop.xlane.xlu0 %502
        %v504 = vrsqrt.pop %v494
        %v505 = vmul.f32 %v504, %v494
        %v506 = vmul.f32 %v505, %v504
        %v507 = vmul.f32 0.5, %v506
        %v508 = vsub.f32 1.5, %v507
        %v509 = vmul.f32 %v504, %v508
        %v510 = vmul.f32 %v494, %v509
        %vm511 = vcmp.eq.f32.partialorder %v494, inf
        %v512 = vsel %vm511, %v494, %v510
        %vm513 = vcmp.eq.f32.partialorder %v494, 0.0
        %v514 = vand.u32 %v494, 2147483648
        %v515 = vsel %vm513, %v514, %v512
        %v516 = vrsqrt.pop %v497
        %v517 = vmul.f32 %v516, %v497
        %v518 = vmul.f32 %v517, %v516
        %v519 = vmul.f32 0.5, %v518
        %v520 = vsub.f32 1.5, %v519
        %v521 = vmul.f32 %v516, %v520
        %v522 = vmul.f32 %v497, %v521
        %vm523 = vcmp.eq.f32.partialorder %v497, inf
        %v524 = vsel %vm523, %v497, %v522
        %vm525 = vcmp.eq.f32.partialorder %v497, 0.0
        %v526 = vand.u32 %v497, 2147483648
        %v527 = vsel %vm525, %v526, %v524
        %v528 = vrsqrt.pop %v500
        %v529 = vmul.f32 %v528, %v500
        %v530 = vmul.f32 %v529, %v528
        %v531 = vmul.f32 0.5, %v530
        %v532 = vsub.f32 1.5, %v531
        %v533 = vmul.f32 %v528, %v532
        %v534 = vmul.f32 %v500, %v533
        %vm535 = vcmp.eq.f32.partialorder %v500, inf
        %v536 = vsel %vm535, %v500, %v534
        %vm537 = vcmp.eq.f32.partialorder %v500, 0.0
        %v538 = vand.u32 %v500, 2147483648
        %v539 = vsel %vm537, %v538, %v536
        %v540 = vrsqrt.pop %v503
        %v541 = vmul.f32 %v540, %v503
        %v542 = vmul.f32 %v541, %v540
        %v543 = vmul.f32 0.5, %v542
        %v544 = vsub.f32 1.5, %v543
        %v545 = vmul.f32 %v540, %v544
        %v546 = vmul.f32 %v503, %v545
        %vm547 = vcmp.eq.f32.partialorder %v503, inf
        %v548 = vsel %vm547, %v503, %v546
        %vm549 = vcmp.eq.f32.partialorder %v503, 0.0
        %v550 = vand.u32 %v503, 2147483648
        %v551 = vsel %vm549, %v550, %v548
        %v552 = vmax.f32 %v515, 1e-12
        %v553 = vmax.f32 %v527, 1e-12
        %v554 = vmax.f32 %v539, 1e-12
        %v555 = vmax.f32 %v551, 1e-12
        %v556 = vrcp.pop %v552
        %v557 = vmul.f32 %v552, %v556
        %v558 = vsub.f32 1.0, %v557
        %v559 = vmul.f32 %v556, %v558
        %v560 = vadd.f32 %v556, %v559
        %vm561 = vweird.f32 %v552
        %vm562 = vweird.f32 %v556
        %vm563 = vmor %vm561, %vm562
        %v564 = vsel %vm563, %v556, %v560
        %v565 = vand.u32 2147483647, %v552
        %vm566 = vcmp.eq.f32.partialorder %v565, 8.507059e+37
        %v567 = vand.u32 %v552, 2147483648
        %v568 = vor.u32 1.1754944e-38, %v567
        %v569 = vsel %vm566, %v568, %v564
        %v570 = vmul.f32 1.0, %v569
        %v571 = vrcp.pop %v553
        %v572 = vmul.f32 %v553, %v571
        %v573 = vsub.f32 1.0, %v572
        %v574 = vmul.f32 %v571, %v573
        %v575 = vadd.f32 %v571, %v574
        %vm576 = vweird.f32 %v553
        %vm577 = vweird.f32 %v571
        %vm578 = vmor %vm576, %vm577
        %v579 = vsel %vm578, %v571, %v575
        %v580 = vand.u32 2147483647, %v553
        %vm581 = vcmp.eq.f32.partialorder %v580, 8.507059e+37
        %v582 = vand.u32 %v553, 2147483648
        %v583 = vor.u32 1.1754944e-38, %v582
        %v584 = vsel %vm581, %v583, %v579
        %v585 = vmul.f32 1.0, %v584
        %v586 = vrcp.pop %v554
        %v587 = vmul.f32 %v554, %v586
        %v588 = vsub.f32 1.0, %v587
        %v589 = vmul.f32 %v586, %v588
        %v590 = vadd.f32 %v586, %v589
        %vm591 = vweird.f32 %v554
        %vm592 = vweird.f32 %v586
        %vm593 = vmor %vm591, %vm592
        %v594 = vsel %vm593, %v586, %v590
        %v595 = vand.u32 2147483647, %v554
        %vm596 = vcmp.eq.f32.partialorder %v595, 8.507059e+37
        %v597 = vand.u32 %v554, 2147483648
        %v598 = vor.u32 1.1754944e-38, %v597
        %v599 = vsel %vm596, %v598, %v594
        %v600 = vmul.f32 1.0, %v599
        %v601 = vrcp.pop %v555
        %v602 = vmul.f32 %v555, %v601
        %v603 = vsub.f32 1.0, %v602
        %v604 = vmul.f32 %v601, %v603
        %v605 = vadd.f32 %v601, %v604
        %vm606 = vweird.f32 %v555
        %vm607 = vweird.f32 %v601
        %vm608 = vmor %vm606, %vm607
        %v609 = vsel %vm608, %v601, %v605
        %v610 = vand.u32 2147483647, %v555
        %vm611 = vcmp.eq.f32.partialorder %v610, 8.507059e+37
        %v612 = vand.u32 %v555, 2147483648
        %v613 = vor.u32 1.1754944e-38, %v612
        %v614 = vsel %vm611, %v613, %v609
        %v615 = vmul.f32 1.0, %v614
        %v616 = vmul.f32 %v475, %v570
        %v617 = vmul.f32 %v477, %v585
        %v618 = vmul.f32 %v482, %v600
        %v619 = vmul.f32 %v484, %v615
        %v620 = vld [vmem:[%s4] sm:$0x1]
        %v622 = vperm.slane %v620, 0
        %v624 = vmul.f32 %v616, %v622
        %v625 = vmul.f32 %v617, %v622
        %v626 = vmul.f32 %v618, %v622
        %v627 = vmul.f32 %v619, %v622
        %v628 = vpack.c.bf16 %v624, %v624
        %v629 = vpack.c.bf16 %v625, %v625
        %v630 = vpack.c.bf16 %v626, %v626
        %v631 = vpack.c.bf16 %v627, %v627
        %vm632 = vcmask 125952
        %633 = vst.msk [vmem:[%s361] sm:$0xf] %vm632, %v628
        %634 = vst.msk [vmem:[%s361 + $0x4] sm:$0xf] %vm632, %v629
        %635 = vst.msk [vmem:[%s361 + $0x8] sm:$0xf] %vm632, %v630
        %636 = vst.msk [vmem:[%s361 + $0xc] sm:$0xf] %vm632, %v631
        %641 = vrot.lane.b32.xlu0 %v487, 96
        %v642 = vpop.permute.xlu0 %641
        %643 = vrot.lane.b32.xlu0 %v488, 96
        %v644 = vpop.permute.xlu0 %643
        %645 = vrot.lane.b32.xlu0 %v489, 96
        %v646 = vpop.permute.xlu0 %645
        %647 = vrot.lane.b32.xlu0 %v490, 96
        %v648 = vpop.permute.xlu0 %647
        %v653 = vsel %vm491, %v642, 0.0
        %654 = vadd.xlane.f32.xlu0 %v653
        %v655 = vpop.xlane.xlu0 %654
        %v656 = vsel %vm491, %v644, 0.0
        %657 = vadd.xlane.f32.xlu0 %v656
        %v658 = vpop.xlane.xlu0 %657
        %v659 = vsel %vm491, %v646, 0.0
        %660 = vadd.xlane.f32.xlu0 %v659
        %v661 = vpop.xlane.xlu0 %660
        %v662 = vsel %vm491, %v648, 0.0
        %663 = vadd.xlane.f32.xlu0 %v662
        %v664 = vpop.xlane.xlu0 %663
        %v665 = vrsqrt.pop %v655
        %v666 = vmul.f32 %v665, %v655
        %v667 = vmul.f32 %v666, %v665
        %v668 = vmul.f32 0.5, %v667
        %v669 = vsub.f32 1.5, %v668
        %v670 = vmul.f32 %v665, %v669
        %v671 = vmul.f32 %v655, %v670
        %vm672 = vcmp.eq.f32.partialorder %v655, inf
        %v673 = vsel %vm672, %v655, %v671
        %vm674 = vcmp.eq.f32.partialorder %v655, 0.0
        %v675 = vand.u32 %v655, 2147483648
        %v676 = vsel %vm674, %v675, %v673
        %v677 = vrsqrt.pop %v658
        %v678 = vmul.f32 %v677, %v658
        %v679 = vmul.f32 %v678, %v677
        %v680 = vmul.f32 0.5, %v679
        %v681 = vsub.f32 1.5, %v680
        %v682 = vmul.f32 %v677, %v681
        %v683 = vmul.f32 %v658, %v682
        %vm684 = vcmp.eq.f32.partialorder %v658, inf
        %v685 = vsel %vm684, %v658, %v683
        %vm686 = vcmp.eq.f32.partialorder %v658, 0.0
        %v687 = vand.u32 %v658, 2147483648
        %v688 = vsel %vm686, %v687, %v685
        %v689 = vrsqrt.pop %v661
        %v690 = vmul.f32 %v689, %v661
        %v691 = vmul.f32 %v690, %v689
        %v692 = vmul.f32 0.5, %v691
        %v693 = vsub.f32 1.5, %v692
        %v694 = vmul.f32 %v689, %v693
        %v695 = vmul.f32 %v661, %v694
        %vm696 = vcmp.eq.f32.partialorder %v661, inf
        %v697 = vsel %vm696, %v661, %v695
        %vm698 = vcmp.eq.f32.partialorder %v661, 0.0
        %v699 = vand.u32 %v661, 2147483648
        %v700 = vsel %vm698, %v699, %v697
        %v701 = vrsqrt.pop %v664
        %v702 = vmul.f32 %v701, %v664
        %v703 = vmul.f32 %v702, %v701
        %v704 = vmul.f32 0.5, %v703
        %v705 = vsub.f32 1.5, %v704
        %v706 = vmul.f32 %v701, %v705
        %v707 = vmul.f32 %v664, %v706
        %vm708 = vcmp.eq.f32.partialorder %v664, inf
        %v709 = vsel %vm708, %v664, %v707
        %vm710 = vcmp.eq.f32.partialorder %v664, 0.0
        %v711 = vand.u32 %v664, 2147483648
        %v712 = vsel %vm710, %v711, %v709
        %v713 = vmax.f32 %v676, 1e-12
        %v714 = vmax.f32 %v688, 1e-12
        %v715 = vmax.f32 %v700, 1e-12
        %v716 = vmax.f32 %v712, 1e-12
        %v717 = vrcp.pop %v713
        %v718 = vmul.f32 %v713, %v717
        %v719 = vsub.f32 1.0, %v718
        %v720 = vmul.f32 %v717, %v719
        %v721 = vadd.f32 %v717, %v720
        %vm722 = vweird.f32 %v713
        %vm723 = vweird.f32 %v717
        %vm724 = vmor %vm722, %vm723
        %v725 = vsel %vm724, %v717, %v721
        %v726 = vand.u32 2147483647, %v713
        %vm727 = vcmp.eq.f32.partialorder %v726, 8.507059e+37
        %v728 = vand.u32 %v713, 2147483648
        %v729 = vor.u32 1.1754944e-38, %v728
        %v730 = vsel %vm727, %v729, %v725
        %v731 = vmul.f32 1.0, %v730
        %v732 = vrcp.pop %v714
        %v733 = vmul.f32 %v714, %v732
        %v734 = vsub.f32 1.0, %v733
        %v735 = vmul.f32 %v732, %v734
        %v736 = vadd.f32 %v732, %v735
        %vm737 = vweird.f32 %v714
        %vm738 = vweird.f32 %v732
        %vm739 = vmor %vm737, %vm738
        %v740 = vsel %vm739, %v732, %v736
        %v741 = vand.u32 2147483647, %v714
        %vm742 = vcmp.eq.f32.partialorder %v741, 8.507059e+37
        %v743 = vand.u32 %v714, 2147483648
        %v744 = vor.u32 1.1754944e-38, %v743
        %v745 = vsel %vm742, %v744, %v740
        %v746 = vmul.f32 1.0, %v745
        %v747 = vrcp.pop %v715
        %v748 = vmul.f32 %v715, %v747
        %v749 = vsub.f32 1.0, %v748
        %v750 = vmul.f32 %v747, %v749
        %v751 = vadd.f32 %v747, %v750
        %vm752 = vweird.f32 %v715
        %vm753 = vweird.f32 %v747
        %vm754 = vmor %vm752, %vm753
        %v755 = vsel %vm754, %v747, %v751
        %v756 = vand.u32 2147483647, %v715
        %vm757 = vcmp.eq.f32.partialorder %v756, 8.507059e+37
        %v758 = vand.u32 %v715, 2147483648
        %v759 = vor.u32 1.1754944e-38, %v758
        %v760 = vsel %vm757, %v759, %v755
        %v761 = vmul.f32 1.0, %v760
        %v762 = vrcp.pop %v716
        %v763 = vmul.f32 %v716, %v762
        %v764 = vsub.f32 1.0, %v763
        %v765 = vmul.f32 %v762, %v764
        %v766 = vadd.f32 %v762, %v765
        %vm767 = vweird.f32 %v716
        %vm768 = vweird.f32 %v762
        %vm769 = vmor %vm767, %vm768
        %v770 = vsel %vm769, %v762, %v766
        %v771 = vand.u32 2147483647, %v716
        %vm772 = vcmp.eq.f32.partialorder %v771, 8.507059e+37
        %v773 = vand.u32 %v716, 2147483648
        %v774 = vor.u32 1.1754944e-38, %v773
        %v775 = vsel %vm772, %v774, %v770
        %v776 = vmul.f32 1.0, %v775
        %v777 = vmul.f32 %v475, %v731
        %v778 = vmul.f32 %v477, %v746
        %v779 = vmul.f32 %v482, %v761
        %v780 = vmul.f32 %v484, %v776
        %v781 = vld [vmem:[%s5] sm:$0x1]
        %v783 = vperm.slane %v781, 0
        %784 = vrot.lane.b32.xlu0 %v783, 32
        %v785 = vpop.permute.xlu0 %784
        %v787 = vmul.f32 %v777, %v785
        %v788 = vmul.f32 %v778, %v785
        %v789 = vmul.f32 %v779, %v785
        %v790 = vmul.f32 %v780, %v785
        %v791 = vpack.c.bf16 %v787, %v787
        %v792 = vpack.c.bf16 %v788, %v788
        %v793 = vpack.c.bf16 %v789, %v789
        %v794 = vpack.c.bf16 %v790, %v790
        %799 = vrot.lane.b32.xlu0 %v791, 96
        %v800 = vpop.permute.xlu0 %799
        %801 = vrot.lane.b32.xlu0 %v792, 96
        %v802 = vpop.permute.xlu0 %801
        %803 = vrot.lane.b32.xlu0 %v793, 96
        %v804 = vpop.permute.xlu0 %803
        %805 = vrot.lane.b32.xlu0 %v794, 96
        %v806 = vpop.permute.xlu0 %805
        %811 = vst.msk [vmem:[%s367] sm:$0xf] %vm632, %v800
        %812 = vst.msk [vmem:[%s367 + $0x4] sm:$0xf] %vm632, %v802
        %813 = vst.msk [vmem:[%s367 + $0x8] sm:$0xf] %vm632, %v804
        %814 = vst.msk [vmem:[%s367 + $0xc] sm:$0xf] %vm632, %v806
        %v815 = vpack.c.bf16 %v475, %v475
        %v816 = vpack.c.bf16 %v477, %v477
        %v817 = vpack.c.bf16 %v482, %v482
        %v818 = vpack.c.bf16 %v484, %v484
        %823 = vrot.lane.b32.xlu0 %v815, 64
        %v824 = vpop.permute.xlu0 %823
        %825 = vrot.lane.b32.xlu0 %v816, 64
        %v826 = vpop.permute.xlu0 %825
        %827 = vrot.lane.b32.xlu0 %v817, 64
        %v828 = vpop.permute.xlu0 %827
        %829 = vrot.lane.b32.xlu0 %v818, 64
        %v830 = vpop.permute.xlu0 %829
        %835 = vst.msk [vmem:[%s373] sm:$0xf] %vm632, %v824
        %836 = vst.msk [vmem:[%s373 + $0x4] sm:$0xf] %vm632, %v826
        %837 = vst.msk [vmem:[%s373 + $0x8] sm:$0xf] %vm632, %v828
        %838 = vst.msk [vmem:[%s373 + $0xc] sm:$0xf] %vm632, %v830
        %s839 = sand.u32 %s179, 1
        %s840 = sand.u32 %s179, 1
        %s841 = smul.addr %s840, 16
        %s842 = scalar_lea.vmem [#allocation6], %s841
        %s843 = sand.u32 %s207, 1
        %s844 = sand.u32 %s207, 1
        %s845 = smul.addr %s844, 16
        %s846 = scalar_lea.vmem [#allocation7], %s845
        %s847 = sand.u32 %s235, 1
        %s848 = sand.u32 %s235, 1
        %s849 = smul.addr %s848, 16
        %s850 = scalar_lea.vmem [#allocation8], %s849
        // Predicated region
        $region53: #{tpu_custom_call.1} parent=43 // pred_check
          %p851 = pneg %p189
        $region54: #{tpu_custom_call.1} parent=43 // pred_check_branch
          %853 = sbr.rel (%p851) target = $region56
        $region55: #{tpu_custom_call.1} parent=43 // pred_region
          %s854 = smul.u32 2, %s29
          %s855 = smul.addr %s28, 8
          %s856 = sadd.s32 %s854, %s855
          %s857 = smul.addr %s856, 4
          %s858 = scalar_lea.vmem %s6, %s857
          // Predicated region
          $region57: #{tpu_custom_call.1} parent=55 // pred_check
            _
          $region58: #{tpu_custom_call.1} parent=55 // pred_check_branch
            %860 = sbr.rel (0) target = $region60
          $region59: #{tpu_custom_call.1} parent=55 // pred_region
            // Predicated region
            $region61: #{tpu_custom_call.1} parent=59 // pred_check
              _
            $region62: #{tpu_custom_call.1} parent=59 // pred_check_branch
              %862 = sbr.rel target = $region64
            $region63: #{tpu_custom_call.1} parent=59 // pred_region
              // Predicated region
              $region76: #{tpu_custom_call.1} parent=63 // pred_check
                _
              $region77: #{tpu_custom_call.1} parent=63 // pred_check_branch
                %884 = sbr.rel (0) target = $region79
              $region78: #{tpu_custom_call.1} parent=63 // pred_region
                loop: start=0, step=1, limit=1
                $region80: #{tpu_custom_call.1} parent=78 // loop_pre_header
                  _
                $region81: #{tpu_custom_call.1} parent=78 // loop_header
                  %s886 = sphi 0, %s890
                  %p887 = scmp.ge.s32.totalorder %s886, 1
                  %s891 = sphi %s842, %s842
                  %s892 = sphi %s858, %s858
                $region82: #{tpu_custom_call.1} parent=78 // loop_header_branch
                  %889 = sbr.rel (%p887) target = $region86
                $region83: #{tpu_custom_call.1} parent=78 // loop_body
                  _
                $region84: #{tpu_custom_call.1} parent=78 // loop_footer
                  %s890 = sadd.s32 1, %s886
                $region85: #{tpu_custom_call.1} parent=78 // loop_footer_branch
                  %885 = sbr.rel target = $region81
                $region86: #{tpu_custom_call.1} parent=78 // loop_exit
                  _
                %s894 = ssub.s32 16, 1
                loop: start=0, step=1, limit=1
                $region87: #{tpu_custom_call.1} parent=78 // loop_pre_header
                  _
                $region88: #{tpu_custom_call.1} parent=78 // loop_header
                  %s896 = sphi 0, %s900
                  %p897 = scmp.ge.s32.totalorder %s896, 1
                  %s901 = sphi %s842, %s842
                  %s902 = sphi %s858, %s858
                $region89: #{tpu_custom_call.1} parent=78 // loop_header_branch
                  %899 = sbr.rel (%p897) target = $region93
                $region90: #{tpu_custom_call.1} parent=78 // loop_body
                  %v903 = vld [vmem:[%s901] sm:%s894]
                  %904 = vst [vmem:[%s902] sm:%s894] %v903
                  %v905 = vld [vmem:[%s901 + $0x4] sm:%s894]
                  %906 = vst [vmem:[%s902 + $0x4] sm:%s894] %v905
                  %v907 = vld [vmem:[%s901 + $0x8] sm:%s894]
                  %908 = vst [vmem:[%s902 + $0x10] sm:%s894] %v907
                  %v909 = vld [vmem:[%s901 + $0xc] sm:%s894]
                  %910 = vst [vmem:[%s902 + $0x14] sm:%s894] %v909
                $region91: #{tpu_custom_call.1} parent=78 // loop_footer
                  %s900 = sadd.s32 1, %s896
                $region92: #{tpu_custom_call.1} parent=78 // loop_footer_branch
                  %895 = sbr.rel target = $region88
                $region93: #{tpu_custom_call.1} parent=78 // loop_exit
                  _
              $region79: #{tpu_custom_call.1} parent=63 // pred_fallthru
                _
            $region64: #{tpu_custom_call.1} parent=59 // pred_fallthru
              _
            // Predicated region
            $region65: #{tpu_custom_call.1} parent=59 // pred_check
              _
            $region66: #{tpu_custom_call.1} parent=59 // pred_check_branch
              %864 = sbr.rel (0) target = $region68
            $region67: #{tpu_custom_call.1} parent=59 // pred_region
              %s866 = ssub.s32 16, 1
              loop: start=0, step=1, limit=1
              $region69: #{tpu_custom_call.1} parent=67 // loop_pre_header
                _
              $region70: #{tpu_custom_call.1} parent=67 // loop_header
                %s868 = sphi 0, %s872
                %p869 = scmp.ge.s32.totalorder %s868, 1
                %s873 = sphi %s842, %s842
                %s874 = sphi %s858, %s858
              $region71: #{tpu_custom_call.1} parent=67 // loop_header_branch
                %871 = sbr.rel (%p869) target = $region75
              $region72: #{tpu_custom_call.1} parent=67 // loop_body
                %v875 = vld [vmem:[%s873] sm:%s866]
                %876 = vst [vmem:[%s874] sm:%s866] %v875
                %v877 = vld [vmem:[%s873 + $0x4] sm:%s866]
                %878 = vst [vmem:[%s874 + $0x4] sm:%s866] %v877
                %v879 = vld [vmem:[%s873 + $0x8] sm:%s866]
                %880 = vst [vmem:[%s874 + $0x10] sm:%s866] %v879
                %v881 = vld [vmem:[%s873 + $0xc] sm:%s866]
                %882 = vst [vmem:[%s874 + $0x14] sm:%s866] %v881
              $region73: #{tpu_custom_call.1} parent=67 // loop_footer
                %s872 = sadd.s32 1, %s868
              $region74: #{tpu_custom_call.1} parent=67 // loop_footer_branch
                %867 = sbr.rel target = $region70
              $region75: #{tpu_custom_call.1} parent=67 // loop_exit
                _
            $region68: #{tpu_custom_call.1} parent=59 // pred_fallthru
              _
          $region60: #{tpu_custom_call.1} parent=55 // pred_fallthru
            _
          %911 = vnop
        $region56: #{tpu_custom_call.1} parent=43 // pred_fallthru
          _
        // Predicated region
        $region94: #{tpu_custom_call.1} parent=43 // pred_check
          %p912 = pneg %p217
        $region95: #{tpu_custom_call.1} parent=43 // pred_check_branch
          %914 = sbr.rel (%p912) target = $region97
        $region96: #{tpu_custom_call.1} parent=43 // pred_region
          %s915 = smul.u32 2, %s29
          %s916 = smul.addr %s28, 8
          %s917 = sadd.s32 %s915, %s916
          %s918 = smul.addr %s917, 4
          %s919 = scalar_lea.vmem %s7, %s918
          // Predicated region
          $region98: #{tpu_custom_call.1} parent=96 // pred_check
            _
          $region99: #{tpu_custom_call.1} parent=96 // pred_check_branch
            %921 = sbr.rel (0) target = $region101
          $region100: #{tpu_custom_call.1} parent=96 // pred_region
            // Predicated region
            $region102: #{tpu_custom_call.1} parent=100 // pred_check
              _
            $region103: #{tpu_custom_call.1} parent=100 // pred_check_branch
              %923 = sbr.rel target = $region105
            $region104: #{tpu_custom_call.1} parent=100 // pred_region
              // Predicated region
              $region117: #{tpu_custom_call.1} parent=104 // pred_check
                _
              $region118: #{tpu_custom_call.1} parent=104 // pred_check_branch
                %945 = sbr.rel (0) target = $region120
              $region119: #{tpu_custom_call.1} parent=104 // pred_region
                loop: start=0, step=1, limit=1
                $region121: #{tpu_custom_call.1} parent=119 // loop_pre_header
                  _
                $region122: #{tpu_custom_call.1} parent=119 // loop_header
                  %s947 = sphi 0, %s951
                  %p948 = scmp.ge.s32.totalorder %s947, 1
                  %s952 = sphi %s846, %s846
                  %s953 = sphi %s919, %s919
                $region123: #{tpu_custom_call.1} parent=119 // loop_header_branch
                  %950 = sbr.rel (%p948) target = $region127
                $region124: #{tpu_custom_call.1} parent=119 // loop_body
                  _
                $region125: #{tpu_custom_call.1} parent=119 // loop_footer
                  %s951 = sadd.s32 1, %s947
                $region126: #{tpu_custom_call.1} parent=119 // loop_footer_branch
                  %946 = sbr.rel target = $region122
                $region127: #{tpu_custom_call.1} parent=119 // loop_exit
                  _
                %s955 = ssub.s32 16, 1
                loop: start=0, step=1, limit=1
                $region128: #{tpu_custom_call.1} parent=119 // loop_pre_header
                  _
                $region129: #{tpu_custom_call.1} parent=119 // loop_header
                  %s957 = sphi 0, %s961
                  %p958 = scmp.ge.s32.totalorder %s957, 1
                  %s962 = sphi %s846, %s846
                  %s963 = sphi %s919, %s919
                $region130: #{tpu_custom_call.1} parent=119 // loop_header_branch
                  %960 = sbr.rel (%p958) target = $region134
                $region131: #{tpu_custom_call.1} parent=119 // loop_body
                  %v964 = vld [vmem:[%s962] sm:%s955]
                  %965 = vst [vmem:[%s963] sm:%s955] %v964
                  %v966 = vld [vmem:[%s962 + $0x4] sm:%s955]
                  %967 = vst [vmem:[%s963 + $0x4] sm:%s955] %v966
                  %v968 = vld [vmem:[%s962 + $0x8] sm:%s955]
                  %969 = vst [vmem:[%s963 + $0x10] sm:%s955] %v968
                  %v970 = vld [vmem:[%s962 + $0xc] sm:%s955]
                  %971 = vst [vmem:[%s963 + $0x14] sm:%s955] %v970
                $region132: #{tpu_custom_call.1} parent=119 // loop_footer
                  %s961 = sadd.s32 1, %s957
                $region133: #{tpu_custom_call.1} parent=119 // loop_footer_branch
                  %956 = sbr.rel target = $region129
                $region134: #{tpu_custom_call.1} parent=119 // loop_exit
                  _
              $region120: #{tpu_custom_call.1} parent=104 // pred_fallthru
                _
            $region105: #{tpu_custom_call.1} parent=100 // pred_fallthru
              _
            // Predicated region
            $region106: #{tpu_custom_call.1} parent=100 // pred_check
              _
            $region107: #{tpu_custom_call.1} parent=100 // pred_check_branch
              %925 = sbr.rel (0) target = $region109
            $region108: #{tpu_custom_call.1} parent=100 // pred_region
              %s927 = ssub.s32 16, 1
              loop: start=0, step=1, limit=1
              $region110: #{tpu_custom_call.1} parent=108 // loop_pre_header
                _
              $region111: #{tpu_custom_call.1} parent=108 // loop_header
                %s929 = sphi 0, %s933
                %p930 = scmp.ge.s32.totalorder %s929, 1
                %s934 = sphi %s846, %s846
                %s935 = sphi %s919, %s919
              $region112: #{tpu_custom_call.1} parent=108 // loop_header_branch
                %932 = sbr.rel (%p930) target = $region116
              $region113: #{tpu_custom_call.1} parent=108 // loop_body
                %v936 = vld [vmem:[%s934] sm:%s927]
                %937 = vst [vmem:[%s935] sm:%s927] %v936
                %v938 = vld [vmem:[%s934 + $0x4] sm:%s927]
                %939 = vst [vmem:[%s935 + $0x4] sm:%s927] %v938
                %v940 = vld [vmem:[%s934 + $0x8] sm:%s927]
                %941 = vst [vmem:[%s935 + $0x10] sm:%s927] %v940
                %v942 = vld [vmem:[%s934 + $0xc] sm:%s927]
                %943 = vst [vmem:[%s935 + $0x14] sm:%s927] %v942
              $region114: #{tpu_custom_call.1} parent=108 // loop_footer
                %s933 = sadd.s32 1, %s929
              $region115: #{tpu_custom_call.1} parent=108 // loop_footer_branch
                %928 = sbr.rel target = $region111
              $region116: #{tpu_custom_call.1} parent=108 // loop_exit
                _
            $region109: #{tpu_custom_call.1} parent=100 // pred_fallthru
              _
          $region101: #{tpu_custom_call.1} parent=96 // pred_fallthru
            _
          %972 = vnop
        $region97: #{tpu_custom_call.1} parent=43 // pred_fallthru
          _
        // Predicated region
        $region135: #{tpu_custom_call.1} parent=43 // pred_check
          %p973 = pneg %p245
        $region136: #{tpu_custom_call.1} parent=43 // pred_check_branch
          %975 = sbr.rel (%p973) target = $region138
        $region137: #{tpu_custom_call.1} parent=43 // pred_region
          %s976 = smul.u32 2, %s29
          %s977 = smul.addr %s28, 8
          %s978 = sadd.s32 %s976, %s977
          %s979 = smul.addr %s978, 4
          %s980 = scalar_lea.vmem %s8, %s979
          // Predicated region
          $region139: #{tpu_custom_call.1} parent=137 // pred_check
            _
          $region140: #{tpu_custom_call.1} parent=137 // pred_check_branch
            %982 = sbr.rel (0) target = $region142
          $region141: #{tpu_custom_call.1} parent=137 // pred_region
            // Predicated region
            $region143: #{tpu_custom_call.1} parent=141 // pred_check
              _
            $region144: #{tpu_custom_call.1} parent=141 // pred_check_branch
              %984 = sbr.rel target = $region146
            $region145: #{tpu_custom_call.1} parent=141 // pred_region
              // Predicated region
              $region158: #{tpu_custom_call.1} parent=145 // pred_check
                _
              $region159: #{tpu_custom_call.1} parent=145 // pred_check_branch
                %1006 = sbr.rel (0) target = $region161
              $region160: #{tpu_custom_call.1} parent=145 // pred_region
                loop: start=0, step=1, limit=1
                $region162: #{tpu_custom_call.1} parent=160 // loop_pre_header
                  _
                $region163: #{tpu_custom_call.1} parent=160 // loop_header
                  %s1008 = sphi 0, %s1012
                  %p1009 = scmp.ge.s32.totalorder %s1008, 1
                  %s1013 = sphi %s850, %s850
                  %s1014 = sphi %s980, %s980
                $region164: #{tpu_custom_call.1} parent=160 // loop_header_branch
                  %1011 = sbr.rel (%p1009) target = $region168
                $region165: #{tpu_custom_call.1} parent=160 // loop_body
                  _
                $region166: #{tpu_custom_call.1} parent=160 // loop_footer
                  %s1012 = sadd.s32 1, %s1008
                $region167: #{tpu_custom_call.1} parent=160 // loop_footer_branch
                  %1007 = sbr.rel target = $region163
                $region168: #{tpu_custom_call.1} parent=160 // loop_exit
                  _
                %s1016 = ssub.s32 16, 1
                loop: start=0, step=1, limit=1
                $region169: #{tpu_custom_call.1} parent=160 // loop_pre_header
                  _
                $region170: #{tpu_custom_call.1} parent=160 // loop_header
                  %s1018 = sphi 0, %s1022
                  %p1019 = scmp.ge.s32.totalorder %s1018, 1
                  %s1023 = sphi %s850, %s850
                  %s1024 = sphi %s980, %s980
                $region171: #{tpu_custom_call.1} parent=160 // loop_header_branch
                  %1021 = sbr.rel (%p1019) target = $region175
                $region172: #{tpu_custom_call.1} parent=160 // loop_body
                  %v1025 = vld [vmem:[%s1023] sm:%s1016]
                  %1026 = vst [vmem:[%s1024] sm:%s1016] %v1025
                  %v1027 = vld [vmem:[%s1023 + $0x4] sm:%s1016]
                  %1028 = vst [vmem:[%s1024 + $0x4] sm:%s1016] %v1027
                  %v1029 = vld [vmem:[%s1023 + $0x8] sm:%s1016]
                  %1030 = vst [vmem:[%s1024 + $0x10] sm:%s1016] %v1029
                  %v1031 = vld [vmem:[%s1023 + $0xc] sm:%s1016]
                  %1032 = vst [vmem:[%s1024 + $0x14] sm:%s1016] %v1031
                $region173: #{tpu_custom_call.1} parent=160 // loop_footer
                  %s1022 = sadd.s32 1, %s1018
                $region174: #{tpu_custom_call.1} parent=160 // loop_footer_branch
                  %1017 = sbr.rel target = $region170
                $region175: #{tpu_custom_call.1} parent=160 // loop_exit
                  _
              $region161: #{tpu_custom_call.1} parent=145 // pred_fallthru
                _
            $region146: #{tpu_custom_call.1} parent=141 // pred_fallthru
              _
            // Predicated region
            $region147: #{tpu_custom_call.1} parent=141 // pred_check
              _
            $region148: #{tpu_custom_call.1} parent=141 // pred_check_branch
              %986 = sbr.rel (0) target = $region150
            $region149: #{tpu_custom_call.1} parent=141 // pred_region
              %s988 = ssub.s32 16, 1
              loop: start=0, step=1, limit=1
              $region151: #{tpu_custom_call.1} parent=149 // loop_pre_header
                _
              $region152: #{tpu_custom_call.1} parent=149 // loop_header
                %s990 = sphi 0, %s994
                %p991 = scmp.ge.s32.totalorder %s990, 1
                %s995 = sphi %s850, %s850
                %s996 = sphi %s980, %s980
              $region153: #{tpu_custom_call.1} parent=149 // loop_header_branch
                %993 = sbr.rel (%p991) target = $region157
              $region154: #{tpu_custom_call.1} parent=149 // loop_body
                %v997 = vld [vmem:[%s995] sm:%s988]
                %998 = vst [vmem:[%s996] sm:%s988] %v997
                %v999 = vld [vmem:[%s995 + $0x4] sm:%s988]
                %1000 = vst [vmem:[%s996 + $0x4] sm:%s988] %v999
                %v1001 = vld [vmem:[%s995 + $0x8] sm:%s988]
                %1002 = vst [vmem:[%s996 + $0x10] sm:%s988] %v1001
                %v1003 = vld [vmem:[%s995 + $0xc] sm:%s988]
                %1004 = vst [vmem:[%s996 + $0x14] sm:%s988] %v1003
              $region155: #{tpu_custom_call.1} parent=149 // loop_footer
                %s994 = sadd.s32 1, %s990
              $region156: #{tpu_custom_call.1} parent=149 // loop_footer_branch
                %989 = sbr.rel target = $region152
              $region157: #{tpu_custom_call.1} parent=149 // loop_exit
                _
            $region150: #{tpu_custom_call.1} parent=141 // pred_fallthru
              _
          $region142: #{tpu_custom_call.1} parent=137 // pred_fallthru
            _
          %1033 = vnop
        $region138: #{tpu_custom_call.1} parent=43 // pred_fallthru
          _
      $region44: #{tpu_custom_call.1} parent=5 // pred_fallthru
        _
      %p1034 = scmp.le.s32.totalorder 2, %s19
      // Predicated region
      $region176: #{tpu_custom_call.1} parent=5 // pred_check
        %p1035 = pneg %p1034
      $region177: #{tpu_custom_call.1} parent=5 // pred_check_branch
        %1037 = sbr.rel (%p1035) target = $region179
      $region178: #{tpu_custom_call.1} parent=5 // pred_region
        %s1038 = ssub.s32 %s19, 2
        // Predicated region
        $region180: #{tpu_custom_call.1} parent=178 // pred_check
          %p1039 = pneg %p195
        $region181: #{tpu_custom_call.1} parent=178 // pred_check_branch
          %1041 = sbr.rel (%p1039) target = $region183
        $region182: #{tpu_custom_call.1} parent=178 // pred_region
          %s1042 = sand.u32 %s180, 1
          %s1043 = sand.u32 %s180, 1
          %s1044 = smul.addr %s1043, 16
          %s1045 = scalar_lea.vmem [#allocation6], %s1044
        $region183: #{tpu_custom_call.1} parent=178 // pred_fallthru
          _
        // Predicated region
        $region184: #{tpu_custom_call.1} parent=178 // pred_check
          %p1046 = pneg %p223
        $region185: #{tpu_custom_call.1} parent=178 // pred_check_branch
          %1048 = sbr.rel (%p1046) target = $region187
        $region186: #{tpu_custom_call.1} parent=178 // pred_region
          %s1049 = sand.u32 %s208, 1
          %s1050 = sand.u32 %s208, 1
          %s1051 = smul.addr %s1050, 16
          %s1052 = scalar_lea.vmem [#allocation7], %s1051
        $region187: #{tpu_custom_call.1} parent=178 // pred_fallthru
          _
        // Predicated region
        $region188: #{tpu_custom_call.1} parent=178 // pred_check
          %p1053 = pneg %p251
        $region189: #{tpu_custom_call.1} parent=178 // pred_check_branch
          %1055 = sbr.rel (%p1053) target = $region191
        $region190: #{tpu_custom_call.1} parent=178 // pred_region
          %s1056 = sand.u32 %s236, 1
          %s1057 = sand.u32 %s236, 1
          %s1058 = smul.addr %s1057, 16
          %s1059 = scalar_lea.vmem [#allocation8], %s1058
        $region191: #{tpu_custom_call.1} parent=178 // pred_fallthru
          _
      $region179: #{tpu_custom_call.1} parent=5 // pred_fallthru
        _
    $region6: #{tpu_custom_call.1} parent=1 // loop_footer
      %s23 = sadd.s32 1, %s19
    $region7: #{tpu_custom_call.1} parent=1 // loop_footer_branch
      %18 = sbr.rel target = $region3
    $region8: #{tpu_custom_call.1} parent=1 // loop_exit
      _
    %1060 = vsyncpa [#allocation3], 1
    %s1061 = scalar_lea.sflag [#allocation3], 1
    %1062 = vsyncpa %s1061, 1
    %1063 = vsyncpa [#allocation5], 1

</llo_original>
